<compile_context>
chip_gen: v7x
topology: tpu7x:2x2x1
jax: 0.10.0
libtpu: 0.0.40
codegen_flags: <defaults>
</compile_context>

<pallas_src>
import functools

import jax
import jax.numpy as jnp
import numpy as np
from jax import lax
from jax.experimental import pallas as pl
from jax.experimental.pallas import tpu as pltpu


def _round_up(x, m):
    return ((x + m - 1) // m) * m


def _rnn_kernel(*refs, n_layers, seq_len, b_pad):
    if n_layers > 1:
        (x_ref, wih0_ref, whh0_ref, b0_ref,
         wih_r_ref, whh_r_ref, br_ref,
         wfc_ref, bfc_ref,
         out_ref, hfin_ref,
         h_scr, xp_scr, hs_scr) = refs
    else:
        (x_ref, wih0_ref, whh0_ref, b0_ref,
         wfc_ref, bfc_ref,
         out_ref, hfin_ref,
         h_scr, xp_scr, hs_scr) = refs
        wih_r_ref = whh_r_ref = br_ref = None

    S = seq_len
    Bp = b_pad
    Hp = whh0_ref.shape[0]

    # ---- hoisted layer-0 input projection: one big lane-dense MXU call ----
    xp_scr[...] = (jnp.dot(x_ref[...], wih0_ref[...],
                           preferred_element_type=jnp.float32)
                   + b0_ref[...])                 # pre-summed (b_ih0 + b_hh0)

    # zero initial hidden state (matches init_hidden)
    h_scr[...] = jnp.zeros_like(h_scr)

    # hoist loop-invariant weight loads / bias broadcasts out of the time loop
    whh0 = whh0_ref[...]                          # (Hp, Hp) transposed W_hh[0]
    if n_layers > 1:
        wihs = [wih_r_ref[l] for l in range(n_layers - 1)]   # (Hp, Hp) each
        whhs = [whh_r_ref[l] for l in range(n_layers - 1)]   # (Hp, Hp) each
        brs = [jnp.broadcast_to(br_ref[l], (Bp, Hp))
               for l in range(n_layers - 1)]                 # (Bp, Hp) each

    def step(t, carry):
        row = pl.multiple_of(t * Bp, Bp)          # sublane-aligned slice start
        # layer 0: only the recurrent matmul remains on the serial path
        h0 = jnp.tanh(xp_scr[pl.ds(row, Bp), :]
                      + jnp.dot(h_scr[pl.ds(0, Bp), :], whh0,
                                preferred_element_type=jnp.float32))
        h_scr[pl.ds(0, Bp), :] = h0
        inp = h0
        # layers > 0: two independent MXU dots (no lane-axis concat)
        for layer in range(1, n_layers):
            hprev = h_scr[pl.ds(layer * Bp, Bp), :]
            pre = (jnp.dot(inp, wihs[layer - 1],
                           preferred_element_type=jnp.float32)
                   + jnp.dot(hprev, whhs[layer - 1],
                             preferred_element_type=jnp.float32)
                   + brs[layer - 1])
            h_new = jnp.tanh(pre)
            h_scr[pl.ds(layer * Bp, Bp), :] = h_new
            inp = h_new
        hs_scr[pl.ds(row, Bp), :] = inp           # collect top-layer output
        return carry

    lax.fori_loop(0, S, step, 0, unroll=True)

    # ---- hoisted final Linear: one big MXU call, single lane-dense store ---
    out_ref[...] = (jnp.dot(hs_scr[...], wfc_ref[...],
                            preferred_element_type=jnp.float32)
                    + bfc_ref[...]).astype(out_ref.dtype)
    hfin_ref[...] = h_scr[...].astype(hfin_ref.dtype)


def rnn_forward(x, params, *, n_layers, hidden_dim, output_size):
    """x: (B, S, I) float32 (torch batch_first convention)."""
    B, S, I = x.shape
    H, O = hidden_dim, output_size
    Bp = _round_up(B, 8)
    Hp = _round_up(H, 128)
    Op = _round_up(O, 128)

    # --- host-side parameter prep (one-time cost, zero-padded) -------------
    def pad2(a, rows, cols):
        return jnp.pad(a, ((0, rows - a.shape[0]), (0, cols - a.shape[1])))

    wih0_t = pad2(params["w_ih0"].T, I, Hp)                        # (I, Hp)
    whh0_t = pad2(params["w_hh"][0].T, Hp, Hp)                     # (Hp, Hp)
    b0 = jnp.pad(params["b_ih"][0] + params["b_hh"][0],
                 (0, Hp - H)).reshape(1, Hp)                       # (1, Hp)
    wfc_t = pad2(params["w_fc"].T, Hp, Op)                         # (Hp, Op)
    bfc = jnp.pad(params["b_fc"], (0, Op - O)).reshape(1, Op)      # (1, Op)

    # lane/sublane-dense 2-D input: (S*Bp, I), zero-padded batch rows
    xt = jnp.transpose(x, (1, 0, 2))                               # (S, B, I)
    xt = jnp.pad(xt, ((0, 0), (0, Bp - B), (0, 0)))                # (S, Bp, I)
    x2d = xt.reshape(S * Bp, I)

    def full(shape):
        n = len(shape)
        return pl.BlockSpec(shape, lambda t: (0,) * n)

    inputs = [x2d, wih0_t, whh0_t, b0]
    in_specs = [
        full((S * Bp, I)),                       # whole sequence, lane-dense
        full((I, Hp)),                           # W_ih layer0 (T, padded)
        full((Hp, Hp)),                          # W_hh layer0 (T, padded)
        full((1, Hp)),                           # b_ih0 + b_hh0 (padded)
    ]
    if n_layers > 1:
        wih_rest = jnp.stack(
            [pad2(params["w_ih_rest"][l].T, Hp, Hp) for l in range(n_layers - 1)])
        whh_rest = jnp.stack(
            [pad2(params["w_hh"][l + 1].T, Hp, Hp) for l in range(n_layers - 1)])
        b_rest = jnp.pad(params["b_ih"][1:] + params["b_hh"][1:],
                         ((0, 0), (0, Hp - H))).reshape(n_layers - 1, 1, Hp)
        inputs += [wih_rest, whh_rest, b_rest]
        in_specs += [full((n_layers - 1, Hp, Hp)),
                     full((n_layers - 1, Hp, Hp)),
                     full((n_layers - 1, 1, Hp))]
    inputs += [wfc_t, bfc]
    in_specs += [full((Hp, Op)), full((1, Op))]

    kernel = functools.partial(_rnn_kernel, n_layers=n_layers,
                               seq_len=S, b_pad=Bp)

    out2d, hfin2d = pl.pallas_call(
        kernel,
        out_shape=(
            jax.ShapeDtypeStruct((S * Bp, Op), jnp.float32),
            jax.ShapeDtypeStruct((n_layers * Bp, Hp), jnp.float32),
        ),
        grid_spec=pltpu.PrefetchScalarGridSpec(
            num_scalar_prefetch=0,
            grid=(1,),                            # whole recurrence in one step
            in_specs=in_specs,
            out_specs=[
                pl.BlockSpec((S * Bp, Op), lambda t: (0, 0)),
                pl.BlockSpec((n_layers * Bp, Hp), lambda t: (0, 0)),
            ],
            scratch_shapes=[
                pltpu.VMEM((n_layers * Bp, Hp), jnp.float32),  # hidden state
                pltpu.VMEM((S * Bp, Hp), jnp.float32),         # x-projection
                pltpu.VMEM((S * Bp, Hp), jnp.float32),         # top-layer outs
            ],
        ),
        compiler_params=pltpu.CompilerParams(
            dimension_semantics=("arbitrary",)),  # recurrence is sequential
    )(*inputs)

    # un-pad and restore torch layout:
    #   out.contiguous().view(-1, hidden_dim) -> fc gives (B*S, O) batch-major
    out = out2d.reshape(S, Bp, Op)[:, :B, :O]
    out = jnp.transpose(out, (1, 0, 2)).reshape(B * S, O)
    h_fin = hfin2d.reshape(n_layers, Bp, Hp)[:, :B, :H]
    return out, h_fin


def rnn_reference(x, params, *, n_layers):
    """Pure-JAX reference matching nn.RNN(tanh) + Linear semantics."""
    B, S, I = x.shape
    H = params["w_hh"].shape[-1]
    h = jnp.zeros((n_layers, B, H), jnp.float32)
    outs = []
    for t in range(S):
        inp = x[:, t, :]
        new_h = []
        for layer in range(n_layers):
            w_ih = params["w_ih0"] if layer == 0 else params["w_ih_rest"][layer - 1]
            pre = (inp @ w_ih.T + params["b_ih"][layer]
                   + h[layer] @ params["w_hh"][layer].T + params["b_hh"][layer])
            hn = jnp.tanh(pre)
            new_h.append(hn)
            inp = hn
        h = jnp.stack(new_h, axis=0)
        outs.append(inp)
    out = jnp.stack(outs, axis=1).reshape(B * S, H)
    out = out @ params["w_fc"].T + params["b_fc"]
    return out, h


def make_params(key, input_size, hidden_dim, output_size, n_layers):
    scale = 1.0 / np.sqrt(hidden_dim)
    keys = jax.random.split(key, 8)
    u = lambda k, shape: jax.random.uniform(k, shape, jnp.float32, -scale, scale)
    return {
        "w_ih0": u(keys[0], (hidden_dim, input_size)),
        "w_ih_rest": u(keys[1], (max(n_layers - 1, 1), hidden_dim, hidden_dim)),
        "w_hh": u(keys[2], (n_layers, hidden_dim, hidden_dim)),
        "b_ih": u(keys[3], (n_layers, hidden_dim)),
        "b_hh": u(keys[4], (n_layers, hidden_dim)),
        "w_fc": u(keys[5], (output_size, hidden_dim)),
        "b_fc": u(keys[6], (output_size,)),
    }


if __name__ == "__main__":
    batch, seq, input_size = 2, 8, 16
    hidden_dim, output_size, n_layers = 32, 8, 2

    key = jax.random.PRNGKey(0)
    pkey, xkey = jax.random.split(key)
    params = make_params(pkey, input_size, hidden_dim, output_size, n_layers)
    x = jax.random.normal(xkey, (batch, seq, input_size), jnp.float32)

    out, hidden = rnn_forward(x, params, n_layers=n_layers,
                              hidden_dim=hidden_dim, output_size=output_size)
    out = jax.block_until_ready(out)
    hidden = jax.block_until_ready(hidden)

    ref_out, ref_hidden = rnn_reference(x, params, n_layers=n_layers)
    assert out.shape == (batch * seq, output_size)
    assert hidden.shape == (n_layers, batch, hidden_dim)
    np.testing.assert_allclose(np.asarray(out), np.asarray(ref_out),
                               rtol=1e-4, atol=1e-4)
    np.testing.assert_allclose(np.asarray(hidden), np.asarray(ref_hidden),
                               rtol=1e-4, atol=1e-4)
    print("KERNEL_OK")
</pallas_src>

<mosaic_0001>
module attributes {stable_mosaic.version = 11 : i64} {
  func.func @_rnn_kernel(%arg0: i32, %arg1: memref<64x16xf32, #tpu.memory_space<vmem>>, %arg2: memref<16x128xf32, #tpu.memory_space<vmem>>, %arg3: memref<128x128xf32, #tpu.memory_space<vmem>>, %arg4: memref<1x128xf32, #tpu.memory_space<vmem>>, %arg5: memref<1x128x128xf32, #tpu.memory_space<vmem>>, %arg6: memref<1x128x128xf32, #tpu.memory_space<vmem>>, %arg7: memref<1x1x128xf32, #tpu.memory_space<vmem>>, %arg8: memref<128x128xf32, #tpu.memory_space<vmem>>, %arg9: memref<1x128xf32, #tpu.memory_space<vmem>>, %arg10: memref<64x128xf32, #tpu.memory_space<vmem>>, %arg11: memref<16x128xf32, #tpu.memory_space<vmem>>, %arg12: memref<16x128xf32, #tpu.memory_space<vmem>>, %arg13: memref<64x128xf32, #tpu.memory_space<vmem>>, %arg14: memref<64x128xf32, #tpu.memory_space<vmem>>) attributes {dimension_semantics = [#tpu.dimension_semantics<arbitrary>], iteration_bounds = array<i64: 1>, scalar_prefetch = 0 : i64, scratch_operands = 3 : i64, tpu.core_type = #tpu.core_type<tc>, window_params = [{pipeline_mode = #tpu.pipeline_mode<synchronous>, transform_indices = @transform_0, window_bounds = array<i64: 64, 16>}, {pipeline_mode = #tpu.pipeline_mode<synchronous>, transform_indices = @transform_1, window_bounds = array<i64: 16, 128>}, {pipeline_mode = #tpu.pipeline_mode<synchronous>, transform_indices = @transform_2, window_bounds = array<i64: 128, 128>}, {pipeline_mode = #tpu.pipeline_mode<synchronous>, transform_indices = @transform_3, window_bounds = array<i64: 1, 128>}, {pipeline_mode = #tpu.pipeline_mode<synchronous>, transform_indices = @transform_4, window_bounds = array<i64: 1, 128, 128>}, {pipeline_mode = #tpu.pipeline_mode<synchronous>, transform_indices = @transform_5, window_bounds = array<i64: 1, 128, 128>}, {pipeline_mode = #tpu.pipeline_mode<synchronous>, transform_indices = @transform_6, window_bounds = array<i64: 1, 1, 128>}, {pipeline_mode = #tpu.pipeline_mode<synchronous>, transform_indices = @transform_7, window_bounds = array<i64: 128, 128>}, {pipeline_mode = #tpu.pipeline_mode<synchronous>, transform_indices = @transform_8, window_bounds = array<i64: 1, 128>}, {pipeline_mode = #tpu.pipeline_mode<synchronous>, transform_indices = @transform_9, window_bounds = array<i64: 64, 128>}, {pipeline_mode = #tpu.pipeline_mode<synchronous>, transform_indices = @transform_10, window_bounds = array<i64: 16, 128>}]} {
    %c0 = arith.constant 0 : index
    %c0_0 = arith.constant 0 : index
    %0 = vector.load %arg1[%c0, %c0_0] : memref<64x16xf32, #tpu.memory_space<vmem>>, vector<64x16xf32>
    %c0_1 = arith.constant 0 : index
    %c0_2 = arith.constant 0 : index
    %1 = vector.load %arg2[%c0_1, %c0_2] : memref<16x128xf32, #tpu.memory_space<vmem>>, vector<16x128xf32>
    %cst = arith.constant dense<0.000000e+00> : vector<64x128xf32>
    %2 = tpu.matmul %0, %1, %cst {dimension_numbers = #tpu.dot_dimension_numbers<[1], [0], [0], [1], [0, 0, 1, 1], [], []>} : vector<64x16xf32>, vector<16x128xf32>, vector<64x128xf32> -> vector<64x128xf32>
    %c0_3 = arith.constant 0 : index
    %c0_4 = arith.constant 0 : index
    %3 = vector.load %arg4[%c0_3, %c0_4] : memref<1x128xf32, #tpu.memory_space<vmem>>, vector<1x128xf32>
    %4 = vector.broadcast %3 : vector<1x128xf32> to vector<64x128xf32>
    %5 = arith.addf %2, %4 : vector<64x128xf32>
    %c0_5 = arith.constant 0 : index
    %c0_6 = arith.constant 0 : index
    %6 = vector.load %arg13[%c0_5, %c0_6] : memref<64x128xf32, #tpu.memory_space<vmem>>, vector<64x128xf32>
    tpu.vector_store %arg13[%c0_5, %c0_6], %5 {strides = array<i32>} : memref<64x128xf32, #tpu.memory_space<vmem>>, vector<64x128xf32>,
    %cst_7 = arith.constant 0.000000e+00 : f32
    %7 = vector.broadcast %cst_7 : f32 to vector<16x128xf32>
    %c0_8 = arith.constant 0 : index
    %c0_9 = arith.constant 0 : index
    %8 = vector.load %arg12[%c0_8, %c0_9] : memref<16x128xf32, #tpu.memory_space<vmem>>, vector<16x128xf32>
    tpu.vector_store %arg12[%c0_8, %c0_9], %7 {strides = array<i32>} : memref<16x128xf32, #tpu.memory_space<vmem>>, vector<16x128xf32>,
    %c0_10 = arith.constant 0 : index
    %c0_11 = arith.constant 0 : index
    %9 = vector.load %arg3[%c0_10, %c0_11] : memref<128x128xf32, #tpu.memory_space<vmem>>, vector<128x128xf32>
    %c0_12 = arith.constant 0 : index
    %c0_13 = arith.constant 0 : index
    %c0_14 = arith.constant 0 : index
    %10 = vector.load %arg5[%c0_12, %c0_13, %c0_14] : memref<1x128x128xf32, #tpu.memory_space<vmem>>, vector<1x128x128xf32>
    %11 = vector.shape_cast %10 : vector<1x128x128xf32> to vector<128x128xf32>
    %c0_15 = arith.constant 0 : index
    %c0_16 = arith.constant 0 : index
    %c0_17 = arith.constant 0 : index
    %12 = vector.load %arg6[%c0_15, %c0_16, %c0_17] : memref<1x128x128xf32, #tpu.memory_space<vmem>>, vector<1x128x128xf32>
    %13 = vector.shape_cast %12 : vector<1x128x128xf32> to vector<128x128xf32>
    %c0_18 = arith.constant 0 : index
    %c0_19 = arith.constant 0 : index
    %c0_20 = arith.constant 0 : index
    %14 = vector.load %arg7[%c0_18, %c0_19, %c0_20] : memref<1x1x128xf32, #tpu.memory_space<vmem>>, vector<1x1x128xf32>
    %15 = vector.shape_cast %14 : vector<1x1x128xf32> to vector<1x128xf32>
    %16 = vector.shape_cast %15 : vector<1x128xf32> to vector<1x128xf32>
    %17 = vector.broadcast %16 : vector<1x128xf32> to vector<8x128xf32>
    %c0_i32 = arith.constant 0 : i32
    %c8_i32 = arith.constant 8 : i32
    %18 = arith.muli %c0_i32, %c8_i32 : i32
    %19 = tpu.assume_multiple %18, 8 : i32
    %20 = arith.index_cast %19 : i32 to index
    %c0_21 = arith.constant 0 : index
    %21 = vector.load %arg13[%20, %c0_21] : memref<64x128xf32, #tpu.memory_space<vmem>>, vector<8x128xf32>
    %c0_22 = arith.constant 0 : index
    %c0_23 = arith.constant 0 : index
    %22 = vector.load %arg12[%c0_22, %c0_23] : memref<16x128xf32, #tpu.memory_space<vmem>>, vector<8x128xf32>
    %cst_24 = arith.constant dense<0.000000e+00> : vector<8x128xf32>
    %23 = tpu.matmul %22, %9, %cst_24 {dimension_numbers = #tpu.dot_dimension_numbers<[1], [0], [0], [1], [0, 0, 1, 1], [], []>} : vector<8x128xf32>, vector<128x128xf32>, vector<8x128xf32> -> vector<8x128xf32>
    %24 = arith.addf %21, %23 : vector<8x128xf32>
    %25 = math.tanh %24 : vector<8x128xf32>
    %c0_25 = arith.constant 0 : index
    %c0_26 = arith.constant 0 : index
    %26 = vector.load %arg12[%c0_25, %c0_26] : memref<16x128xf32, #tpu.memory_space<vmem>>, vector<8x128xf32>
    tpu.vector_store %arg12[%c0_25, %c0_26], %25 {strides = array<i32>} : memref<16x128xf32, #tpu.memory_space<vmem>>, vector<8x128xf32>,
    %c8 = arith.constant 8 : index
    %c0_27 = arith.constant 0 : index
    %27 = vector.load %arg12[%c8, %c0_27] : memref<16x128xf32, #tpu.memory_space<vmem>>, vector<8x128xf32>
    %cst_28 = arith.constant dense<0.000000e+00> : vector<8x128xf32>
    %28 = tpu.matmul %25, %11, %cst_28 {dimension_numbers = #tpu.dot_dimension_numbers<[1], [0], [0], [1], [0, 0, 1, 1], [], []>} : vector<8x128xf32>, vector<128x128xf32>, vector<8x128xf32> -> vector<8x128xf32>
    %cst_29 = arith.constant dense<0.000000e+00> : vector<8x128xf32>
    %29 = tpu.matmul %27, %13, %cst_29 {dimension_numbers = #tpu.dot_dimension_numbers<[1], [0], [0], [1], [0, 0, 1, 1], [], []>} : vector<8x128xf32>, vector<128x128xf32>, vector<8x128xf32> -> vector<8x128xf32>
    %30 = arith.addf %28, %29 : vector<8x128xf32>
    %31 = arith.addf %30, %17 : vector<8x128xf32>
    %32 = math.tanh %31 : vector<8x128xf32>
    %c8_30 = arith.constant 8 : index
    %c0_31 = arith.constant 0 : index
    %33 = vector.load %arg12[%c8_30, %c0_31] : memref<16x128xf32, #tpu.memory_space<vmem>>, vector<8x128xf32>
    tpu.vector_store %arg12[%c8_30, %c0_31], %32 {strides = array<i32>} : memref<16x128xf32, #tpu.memory_space<vmem>>, vector<8x128xf32>,
    %34 = arith.index_cast %19 : i32 to index
    %c0_32 = arith.constant 0 : index
    %35 = vector.load %arg14[%34, %c0_32] : memref<64x128xf32, #tpu.memory_space<vmem>>, vector<8x128xf32>
    tpu.vector_store %arg14[%34, %c0_32], %32 {strides = array<i32>} : memref<64x128xf32, #tpu.memory_space<vmem>>, vector<8x128xf32>,
    %c1_i32 = arith.constant 1 : i32
    %c8_i32_33 = arith.constant 8 : i32
    %36 = arith.muli %c1_i32, %c8_i32_33 : i32
    %37 = tpu.assume_multiple %36, 8 : i32
    %38 = arith.index_cast %37 : i32 to index
    %c0_34 = arith.constant 0 : index
    %39 = vector.load %arg13[%38, %c0_34] : memref<64x128xf32, #tpu.memory_space<vmem>>, vector<8x128xf32>
    %c0_35 = arith.constant 0 : index
    %c0_36 = arith.constant 0 : index
    %40 = vector.load %arg12[%c0_35, %c0_36] : memref<16x128xf32, #tpu.memory_space<vmem>>, vector<8x128xf32>
    %cst_37 = arith.constant dense<0.000000e+00> : vector<8x128xf32>
    %41 = tpu.matmul %40, %9, %cst_37 {dimension_numbers = #tpu.dot_dimension_numbers<[1], [0], [0], [1], [0, 0, 1, 1], [], []>} : vector<8x128xf32>, vector<128x128xf32>, vector<8x128xf32> -> vector<8x128xf32>
    %42 = arith.addf %39, %41 : vector<8x128xf32>
    %43 = math.tanh %42 : vector<8x128xf32>
    %c0_38 = arith.constant 0 : index
    %c0_39 = arith.constant 0 : index
    %44 = vector.load %arg12[%c0_38, %c0_39] : memref<16x128xf32, #tpu.memory_space<vmem>>, vector<8x128xf32>
    tpu.vector_store %arg12[%c0_38, %c0_39], %43 {strides = array<i32>} : memref<16x128xf32, #tpu.memory_space<vmem>>, vector<8x128xf32>,
    %c8_40 = arith.constant 8 : index
    %c0_41 = arith.constant 0 : index
    %45 = vector.load %arg12[%c8_40, %c0_41] : memref<16x128xf32, #tpu.memory_space<vmem>>, vector<8x128xf32>
    %cst_42 = arith.constant dense<0.000000e+00> : vector<8x128xf32>
    %46 = tpu.matmul %43, %11, %cst_42 {dimension_numbers = #tpu.dot_dimension_numbers<[1], [0], [0], [1], [0, 0, 1, 1], [], []>} : vector<8x128xf32>, vector<128x128xf32>, vector<8x128xf32> -> vector<8x128xf32>
    %cst_43 = arith.constant dense<0.000000e+00> : vector<8x128xf32>
    %47 = tpu.matmul %45, %13, %cst_43 {dimension_numbers = #tpu.dot_dimension_numbers<[1], [0], [0], [1], [0, 0, 1, 1], [], []>} : vector<8x128xf32>, vector<128x128xf32>, vector<8x128xf32> -> vector<8x128xf32>
    %48 = arith.addf %46, %47 : vector<8x128xf32>
    %49 = arith.addf %48, %17 : vector<8x128xf32>
    %50 = math.tanh %49 : vector<8x128xf32>
    %c8_44 = arith.constant 8 : index
    %c0_45 = arith.constant 0 : index
    %51 = vector.load %arg12[%c8_44, %c0_45] : memref<16x128xf32, #tpu.memory_space<vmem>>, vector<8x128xf32>
    tpu.vector_store %arg12[%c8_44, %c0_45], %50 {strides = array<i32>} : memref<16x128xf32, #tpu.memory_space<vmem>>, vector<8x128xf32>,
    %52 = arith.index_cast %37 : i32 to index
    %c0_46 = arith.constant 0 : index
    %53 = vector.load %arg14[%52, %c0_46] : memref<64x128xf32, #tpu.memory_space<vmem>>, vector<8x128xf32>
    tpu.vector_store %arg14[%52, %c0_46], %50 {strides = array<i32>} : memref<64x128xf32, #tpu.memory_space<vmem>>, vector<8x128xf32>,
    %c2_i32 = arith.constant 2 : i32
    %c8_i32_47 = arith.constant 8 : i32
    %54 = arith.muli %c2_i32, %c8_i32_47 : i32
    %55 = tpu.assume_multiple %54, 8 : i32
    %56 = arith.index_cast %55 : i32 to index
    %c0_48 = arith.constant 0 : index
    %57 = vector.load %arg13[%56, %c0_48] : memref<64x128xf32, #tpu.memory_space<vmem>>, vector<8x128xf32>
    %c0_49 = arith.constant 0 : index
    %c0_50 = arith.constant 0 : index
    %58 = vector.load %arg12[%c0_49, %c0_50] : memref<16x128xf32, #tpu.memory_space<vmem>>, vector<8x128xf32>
    %cst_51 = arith.constant dense<0.000000e+00> : vector<8x128xf32>
    %59 = tpu.matmul %58, %9, %cst_51 {dimension_numbers = #tpu.dot_dimension_numbers<[1], [0], [0], [1], [0, 0, 1, 1], [], []>} : vector<8x128xf32>, vector<128x128xf32>, vector<8x128xf32> -> vector<8x128xf32>
    %60 = arith.addf %57, %59 : vector<8x128xf32>
    %61 = math.tanh %60 : vector<8x128xf32>
    %c0_52 = arith.constant 0 : index
    %c0_53 = arith.constant 0 : index
    %62 = vector.load %arg12[%c0_52, %c0_53] : memref<16x128xf32, #tpu.memory_space<vmem>>, vector<8x128xf32>
    tpu.vector_store %arg12[%c0_52, %c0_53], %61 {strides = array<i32>} : memref<16x128xf32, #tpu.memory_space<vmem>>, vector<8x128xf32>,
    %c8_54 = arith.constant 8 : index
    %c0_55 = arith.constant 0 : index
    %63 = vector.load %arg12[%c8_54, %c0_55] : memref<16x128xf32, #tpu.memory_space<vmem>>, vector<8x128xf32>
    %cst_56 = arith.constant dense<0.000000e+00> : vector<8x128xf32>
    %64 = tpu.matmul %61, %11, %cst_56 {dimension_numbers = #tpu.dot_dimension_numbers<[1], [0], [0], [1], [0, 0, 1, 1], [], []>} : vector<8x128xf32>, vector<128x128xf32>, vector<8x128xf32> -> vector<8x128xf32>
    %cst_57 = arith.constant dense<0.000000e+00> : vector<8x128xf32>
    %65 = tpu.matmul %63, %13, %cst_57 {dimension_numbers = #tpu.dot_dimension_numbers<[1], [0], [0], [1], [0, 0, 1, 1], [], []>} : vector<8x128xf32>, vector<128x128xf32>, vector<8x128xf32> -> vector<8x128xf32>
    %66 = arith.addf %64, %65 : vector<8x128xf32>
    %67 = arith.addf %66, %17 : vector<8x128xf32>
    %68 = math.tanh %67 : vector<8x128xf32>
    %c8_58 = arith.constant 8 : index
    %c0_59 = arith.constant 0 : index
    %69 = vector.load %arg12[%c8_58, %c0_59] : memref<16x128xf32, #tpu.memory_space<vmem>>, vector<8x128xf32>
    tpu.vector_store %arg12[%c8_58, %c0_59], %68 {strides = array<i32>} : memref<16x128xf32, #tpu.memory_space<vmem>>, vector<8x128xf32>,
    %70 = arith.index_cast %55 : i32 to index
    %c0_60 = arith.constant 0 : index
    %71 = vector.load %arg14[%70, %c0_60] : memref<64x128xf32, #tpu.memory_space<vmem>>, vector<8x128xf32>
    tpu.vector_store %arg14[%70, %c0_60], %68 {strides = array<i32>} : memref<64x128xf32, #tpu.memory_space<vmem>>, vector<8x128xf32>,
    %c3_i32 = arith.constant 3 : i32
    %c8_i32_61 = arith.constant 8 : i32
    %72 = arith.muli %c3_i32, %c8_i32_61 : i32
    %73 = tpu.assume_multiple %72, 8 : i32
    %74 = arith.index_cast %73 : i32 to index
    %c0_62 = arith.constant 0 : index
    %75 = vector.load %arg13[%74, %c0_62] : memref<64x128xf32, #tpu.memory_space<vmem>>, vector<8x128xf32>
    %c0_63 = arith.constant 0 : index
    %c0_64 = arith.constant 0 : index
    %76 = vector.load %arg12[%c0_63, %c0_64] : memref<16x128xf32, #tpu.memory_space<vmem>>, vector<8x128xf32>
    %cst_65 = arith.constant dense<0.000000e+00> : vector<8x128xf32>
    %77 = tpu.matmul %76, %9, %cst_65 {dimension_numbers = #tpu.dot_dimension_numbers<[1], [0], [0], [1], [0, 0, 1, 1], [], []>} : vector<8x128xf32>, vector<128x128xf32>, vector<8x128xf32> -> vector<8x128xf32>
    %78 = arith.addf %75, %77 : vector<8x128xf32>
    %79 = math.tanh %78 : vector<8x128xf32>
    %c0_66 = arith.constant 0 : index
    %c0_67 = arith.constant 0 : index
    %80 = vector.load %arg12[%c0_66, %c0_67] : memref<16x128xf32, #tpu.memory_space<vmem>>, vector<8x128xf32>
    tpu.vector_store %arg12[%c0_66, %c0_67], %79 {strides = array<i32>} : memref<16x128xf32, #tpu.memory_space<vmem>>, vector<8x128xf32>,
    %c8_68 = arith.constant 8 : index
    %c0_69 = arith.constant 0 : index
    %81 = vector.load %arg12[%c8_68, %c0_69] : memref<16x128xf32, #tpu.memory_space<vmem>>, vector<8x128xf32>
    %cst_70 = arith.constant dense<0.000000e+00> : vector<8x128xf32>
    %82 = tpu.matmul %79, %11, %cst_70 {dimension_numbers = #tpu.dot_dimension_numbers<[1], [0], [0], [1], [0, 0, 1, 1], [], []>} : vector<8x128xf32>, vector<128x128xf32>, vector<8x128xf32> -> vector<8x128xf32>
    %cst_71 = arith.constant dense<0.000000e+00> : vector<8x128xf32>
    %83 = tpu.matmul %81, %13, %cst_71 {dimension_numbers = #tpu.dot_dimension_numbers<[1], [0], [0], [1], [0, 0, 1, 1], [], []>} : vector<8x128xf32>, vector<128x128xf32>, vector<8x128xf32> -> vector<8x128xf32>
    %84 = arith.addf %82, %83 : vector<8x128xf32>
    %85 = arith.addf %84, %17 : vector<8x128xf32>
    %86 = math.tanh %85 : vector<8x128xf32>
    %c8_72 = arith.constant 8 : index
    %c0_73 = arith.constant 0 : index
    %87 = vector.load %arg12[%c8_72, %c0_73] : memref<16x128xf32, #tpu.memory_space<vmem>>, vector<8x128xf32>
    tpu.vector_store %arg12[%c8_72, %c0_73], %86 {strides = array<i32>} : memref<16x128xf32, #tpu.memory_space<vmem>>, vector<8x128xf32>,
    %88 = arith.index_cast %73 : i32 to index
    %c0_74 = arith.constant 0 : index
    %89 = vector.load %arg14[%88, %c0_74] : memref<64x128xf32, #tpu.memory_space<vmem>>, vector<8x128xf32>
    tpu.vector_store %arg14[%88, %c0_74], %86 {strides = array<i32>} : memref<64x128xf32, #tpu.memory_space<vmem>>, vector<8x128xf32>,
    %c4_i32 = arith.constant 4 : i32
    %c8_i32_75 = arith.constant 8 : i32
    %90 = arith.muli %c4_i32, %c8_i32_75 : i32
    %91 = tpu.assume_multiple %90, 8 : i32
    %92 = arith.index_cast %91 : i32 to index
    %c0_76 = arith.constant 0 : index
    %93 = vector.load %arg13[%92, %c0_76] : memref<64x128xf32, #tpu.memory_space<vmem>>, vector<8x128xf32>
    %c0_77 = arith.constant 0 : index
    %c0_78 = arith.constant 0 : index
    %94 = vector.load %arg12[%c0_77, %c0_78] : memref<16x128xf32, #tpu.memory_space<vmem>>, vector<8x128xf32>
    %cst_79 = arith.constant dense<0.000000e+00> : vector<8x128xf32>
    %95 = tpu.matmul %94, %9, %cst_79 {dimension_numbers = #tpu.dot_dimension_numbers<[1], [0], [0], [1], [0, 0, 1, 1], [], []>} : vector<8x128xf32>, vector<128x128xf32>, vector<8x128xf32> -> vector<8x128xf32>
    %96 = arith.addf %93, %95 : vector<8x128xf32>
    %97 = math.tanh %96 : vector<8x128xf32>
    %c0_80 = arith.constant 0 : index
    %c0_81 = arith.constant 0 : index
    %98 = vector.load %arg12[%c0_80, %c0_81] : memref<16x128xf32, #tpu.memory_space<vmem>>, vector<8x128xf32>
    tpu.vector_store %arg12[%c0_80, %c0_81], %97 {strides = array<i32>} : memref<16x128xf32, #tpu.memory_space<vmem>>, vector<8x128xf32>,
    %c8_82 = arith.constant 8 : index
    %c0_83 = arith.constant 0 : index
    %99 = vector.load %arg12[%c8_82, %c0_83] : memref<16x128xf32, #tpu.memory_space<vmem>>, vector<8x128xf32>
    %cst_84 = arith.constant dense<0.000000e+00> : vector<8x128xf32>
    %100 = tpu.matmul %97, %11, %cst_84 {dimension_numbers = #tpu.dot_dimension_numbers<[1], [0], [0], [1], [0, 0, 1, 1], [], []>} : vector<8x128xf32>, vector<128x128xf32>, vector<8x128xf32> -> vector<8x128xf32>
    %cst_85 = arith.constant dense<0.000000e+00> : vector<8x128xf32>
    %101 = tpu.matmul %99, %13, %cst_85 {dimension_numbers = #tpu.dot_dimension_numbers<[1], [0], [0], [1], [0, 0, 1, 1], [], []>} : vector<8x128xf32>, vector<128x128xf32>, vector<8x128xf32> -> vector<8x128xf32>
    %102 = arith.addf %100, %101 : vector<8x128xf32>
    %103 = arith.addf %102, %17 : vector<8x128xf32>
    %104 = math.tanh %103 : vector<8x128xf32>
    %c8_86 = arith.constant 8 : index
    %c0_87 = arith.constant 0 : index
    %105 = vector.load %arg12[%c8_86, %c0_87] : memref<16x128xf32, #tpu.memory_space<vmem>>, vector<8x128xf32>
    tpu.vector_store %arg12[%c8_86, %c0_87], %104 {strides = array<i32>} : memref<16x128xf32, #tpu.memory_space<vmem>>, vector<8x128xf32>,
    %106 = arith.index_cast %91 : i32 to index
    %c0_88 = arith.constant 0 : index
    %107 = vector.load %arg14[%106, %c0_88] : memref<64x128xf32, #tpu.memory_space<vmem>>, vector<8x128xf32>
    tpu.vector_store %arg14[%106, %c0_88], %104 {strides = array<i32>} : memref<64x128xf32, #tpu.memory_space<vmem>>, vector<8x128xf32>,
    %c5_i32 = arith.constant 5 : i32
    %c8_i32_89 = arith.constant 8 : i32
    %108 = arith.muli %c5_i32, %c8_i32_89 : i32
    %109 = tpu.assume_multiple %108, 8 : i32
    %110 = arith.index_cast %109 : i32 to index
    %c0_90 = arith.constant 0 : index
    %111 = vector.load %arg13[%110, %c0_90] : memref<64x128xf32, #tpu.memory_space<vmem>>, vector<8x128xf32>
    %c0_91 = arith.constant 0 : index
    %c0_92 = arith.constant 0 : index
    %112 = vector.load %arg12[%c0_91, %c0_92] : memref<16x128xf32, #tpu.memory_space<vmem>>, vector<8x128xf32>
    %cst_93 = arith.constant dense<0.000000e+00> : vector<8x128xf32>
    %113 = tpu.matmul %112, %9, %cst_93 {dimension_numbers = #tpu.dot_dimension_numbers<[1], [0], [0], [1], [0, 0, 1, 1], [], []>} : vector<8x128xf32>, vector<128x128xf32>, vector<8x128xf32> -> vector<8x128xf32>
    %114 = arith.addf %111, %113 : vector<8x128xf32>
    %115 = math.tanh %114 : vector<8x128xf32>
    %c0_94 = arith.constant 0 : index
    %c0_95 = arith.constant 0 : index
    %116 = vector.load %arg12[%c0_94, %c0_95] : memref<16x128xf32, #tpu.memory_space<vmem>>, vector<8x128xf32>
    tpu.vector_store %arg12[%c0_94, %c0_95], %115 {strides = array<i32>} : memref<16x128xf32, #tpu.memory_space<vmem>>, vector<8x128xf32>,
    %c8_96 = arith.constant 8 : index
    %c0_97 = arith.constant 0 : index
    %117 = vector.load %arg12[%c8_96, %c0_97] : memref<16x128xf32, #tpu.memory_space<vmem>>, vector<8x128xf32>
    %cst_98 = arith.constant dense<0.000000e+00> : vector<8x128xf32>
    %118 = tpu.matmul %115, %11, %cst_98 {dimension_numbers = #tpu.dot_dimension_numbers<[1], [0], [0], [1], [0, 0, 1, 1], [], []>} : vector<8x128xf32>, vector<128x128xf32>, vector<8x128xf32> -> vector<8x128xf32>
    %cst_99 = arith.constant dense<0.000000e+00> : vector<8x128xf32>
    %119 = tpu.matmul %117, %13, %cst_99 {dimension_numbers = #tpu.dot_dimension_numbers<[1], [0], [0], [1], [0, 0, 1, 1], [], []>} : vector<8x128xf32>, vector<128x128xf32>, vector<8x128xf32> -> vector<8x128xf32>
    %120 = arith.addf %118, %119 : vector<8x128xf32>
    %121 = arith.addf %120, %17 : vector<8x128xf32>
    %122 = math.tanh %121 : vector<8x128xf32>
    %c8_100 = arith.constant 8 : index
    %c0_101 = arith.constant 0 : index
    %123 = vector.load %arg12[%c8_100, %c0_101] : memref<16x128xf32, #tpu.memory_space<vmem>>, vector<8x128xf32>
    tpu.vector_store %arg12[%c8_100, %c0_101], %122 {strides = array<i32>} : memref<16x128xf32, #tpu.memory_space<vmem>>, vector<8x128xf32>,
    %124 = arith.index_cast %109 : i32 to index
    %c0_102 = arith.constant 0 : index
    %125 = vector.load %arg14[%124, %c0_102] : memref<64x128xf32, #tpu.memory_space<vmem>>, vector<8x128xf32>
    tpu.vector_store %arg14[%124, %c0_102], %122 {strides = array<i32>} : memref<64x128xf32, #tpu.memory_space<vmem>>, vector<8x128xf32>,
    %c6_i32 = arith.constant 6 : i32
    %c8_i32_103 = arith.constant 8 : i32
    %126 = arith.muli %c6_i32, %c8_i32_103 : i32
    %127 = tpu.assume_multiple %126, 8 : i32
    %128 = arith.index_cast %127 : i32 to index
    %c0_104 = arith.constant 0 : index
    %129 = vector.load %arg13[%128, %c0_104] : memref<64x128xf32, #tpu.memory_space<vmem>>, vector<8x128xf32>
    %c0_105 = arith.constant 0 : index
    %c0_106 = arith.constant 0 : index
    %130 = vector.load %arg12[%c0_105, %c0_106] : memref<16x128xf32, #tpu.memory_space<vmem>>, vector<8x128xf32>
    %cst_107 = arith.constant dense<0.000000e+00> : vector<8x128xf32>
    %131 = tpu.matmul %130, %9, %cst_107 {dimension_numbers = #tpu.dot_dimension_numbers<[1], [0], [0], [1], [0, 0, 1, 1], [], []>} : vector<8x128xf32>, vector<128x128xf32>, vector<8x128xf32> -> vector<8x128xf32>
    %132 = arith.addf %129, %131 : vector<8x128xf32>
    %133 = math.tanh %132 : vector<8x128xf32>
    %c0_108 = arith.constant 0 : index
    %c0_109 = arith.constant 0 : index
    %134 = vector.load %arg12[%c0_108, %c0_109] : memref<16x128xf32, #tpu.memory_space<vmem>>, vector<8x128xf32>
    tpu.vector_store %arg12[%c0_108, %c0_109], %133 {strides = array<i32>} : memref<16x128xf32, #tpu.memory_space<vmem>>, vector<8x128xf32>,
    %c8_110 = arith.constant 8 : index
    %c0_111 = arith.constant 0 : index
    %135 = vector.load %arg12[%c8_110, %c0_111] : memref<16x128xf32, #tpu.memory_space<vmem>>, vector<8x128xf32>
    %cst_112 = arith.constant dense<0.000000e+00> : vector<8x128xf32>
    %136 = tpu.matmul %133, %11, %cst_112 {dimension_numbers = #tpu.dot_dimension_numbers<[1], [0], [0], [1], [0, 0, 1, 1], [], []>} : vector<8x128xf32>, vector<128x128xf32>, vector<8x128xf32> -> vector<8x128xf32>
    %cst_113 = arith.constant dense<0.000000e+00> : vector<8x128xf32>
    %137 = tpu.matmul %135, %13, %cst_113 {dimension_numbers = #tpu.dot_dimension_numbers<[1], [0], [0], [1], [0, 0, 1, 1], [], []>} : vector<8x128xf32>, vector<128x128xf32>, vector<8x128xf32> -> vector<8x128xf32>
    %138 = arith.addf %136, %137 : vector<8x128xf32>
    %139 = arith.addf %138, %17 : vector<8x128xf32>
    %140 = math.tanh %139 : vector<8x128xf32>
    %c8_114 = arith.constant 8 : index
    %c0_115 = arith.constant 0 : index
    %141 = vector.load %arg12[%c8_114, %c0_115] : memref<16x128xf32, #tpu.memory_space<vmem>>, vector<8x128xf32>
    tpu.vector_store %arg12[%c8_114, %c0_115], %140 {strides = array<i32>} : memref<16x128xf32, #tpu.memory_space<vmem>>, vector<8x128xf32>,
    %142 = arith.index_cast %127 : i32 to index
    %c0_116 = arith.constant 0 : index
    %143 = vector.load %arg14[%142, %c0_116] : memref<64x128xf32, #tpu.memory_space<vmem>>, vector<8x128xf32>
    tpu.vector_store %arg14[%142, %c0_116], %140 {strides = array<i32>} : memref<64x128xf32, #tpu.memory_space<vmem>>, vector<8x128xf32>,
    %c7_i32 = arith.constant 7 : i32
    %c8_i32_117 = arith.constant 8 : i32
    %144 = arith.muli %c7_i32, %c8_i32_117 : i32
    %145 = tpu.assume_multiple %144, 8 : i32
    %146 = arith.index_cast %145 : i32 to index
    %c0_118 = arith.constant 0 : index
    %147 = vector.load %arg13[%146, %c0_118] : memref<64x128xf32, #tpu.memory_space<vmem>>, vector<8x128xf32>
    %c0_119 = arith.constant 0 : index
    %c0_120 = arith.constant 0 : index
    %148 = vector.load %arg12[%c0_119, %c0_120] : memref<16x128xf32, #tpu.memory_space<vmem>>, vector<8x128xf32>
    %cst_121 = arith.constant dense<0.000000e+00> : vector<8x128xf32>
    %149 = tpu.matmul %148, %9, %cst_121 {dimension_numbers = #tpu.dot_dimension_numbers<[1], [0], [0], [1], [0, 0, 1, 1], [], []>} : vector<8x128xf32>, vector<128x128xf32>, vector<8x128xf32> -> vector<8x128xf32>
    %150 = arith.addf %147, %149 : vector<8x128xf32>
    %151 = math.tanh %150 : vector<8x128xf32>
    %c0_122 = arith.constant 0 : index
    %c0_123 = arith.constant 0 : index
    %152 = vector.load %arg12[%c0_122, %c0_123] : memref<16x128xf32, #tpu.memory_space<vmem>>, vector<8x128xf32>
    tpu.vector_store %arg12[%c0_122, %c0_123], %151 {strides = array<i32>} : memref<16x128xf32, #tpu.memory_space<vmem>>, vector<8x128xf32>,
    %c8_124 = arith.constant 8 : index
    %c0_125 = arith.constant 0 : index
    %153 = vector.load %arg12[%c8_124, %c0_125] : memref<16x128xf32, #tpu.memory_space<vmem>>, vector<8x128xf32>
    %cst_126 = arith.constant dense<0.000000e+00> : vector<8x128xf32>
    %154 = tpu.matmul %151, %11, %cst_126 {dimension_numbers = #tpu.dot_dimension_numbers<[1], [0], [0], [1], [0, 0, 1, 1], [], []>} : vector<8x128xf32>, vector<128x128xf32>, vector<8x128xf32> -> vector<8x128xf32>
    %cst_127 = arith.constant dense<0.000000e+00> : vector<8x128xf32>
    %155 = tpu.matmul %153, %13, %cst_127 {dimension_numbers = #tpu.dot_dimension_numbers<[1], [0], [0], [1], [0, 0, 1, 1], [], []>} : vector<8x128xf32>, vector<128x128xf32>, vector<8x128xf32> -> vector<8x128xf32>
    %156 = arith.addf %154, %155 : vector<8x128xf32>
    %157 = arith.addf %156, %17 : vector<8x128xf32>
    %158 = math.tanh %157 : vector<8x128xf32>
    %c8_128 = arith.constant 8 : index
    %c0_129 = arith.constant 0 : index
    %159 = vector.load %arg12[%c8_128, %c0_129] : memref<16x128xf32, #tpu.memory_space<vmem>>, vector<8x128xf32>
    tpu.vector_store %arg12[%c8_128, %c0_129], %158 {strides = array<i32>} : memref<16x128xf32, #tpu.memory_space<vmem>>, vector<8x128xf32>,
    %160 = arith.index_cast %145 : i32 to index
    %c0_130 = arith.constant 0 : index
    %161 = vector.load %arg14[%160, %c0_130] : memref<64x128xf32, #tpu.memory_space<vmem>>, vector<8x128xf32>
    tpu.vector_store %arg14[%160, %c0_130], %158 {strides = array<i32>} : memref<64x128xf32, #tpu.memory_space<vmem>>, vector<8x128xf32>,
    %c8_i32_131 = arith.constant 8 : i32
    %c0_132 = arith.constant 0 : index
    %c0_133 = arith.constant 0 : index
    %162 = vector.load %arg14[%c0_132, %c0_133] : memref<64x128xf32, #tpu.memory_space<vmem>>, vector<64x128xf32>
    %c0_134 = arith.constant 0 : index
    %c0_135 = arith.constant 0 : index
    %163 = vector.load %arg8[%c0_134, %c0_135] : memref<128x128xf32, #tpu.memory_space<vmem>>, vector<128x128xf32>
    %cst_136 = arith.constant dense<0.000000e+00> : vector<64x128xf32>
    %164 = tpu.matmul %162, %163, %cst_136 {dimension_numbers = #tpu.dot_dimension_numbers<[1], [0], [0], [1], [0, 0, 1, 1], [], []>} : vector<64x128xf32>, vector<128x128xf32>, vector<64x128xf32> -> vector<64x128xf32>
    %c0_137 = arith.constant 0 : index
    %c0_138 = arith.constant 0 : index
    %165 = vector.load %arg9[%c0_137, %c0_138] : memref<1x128xf32, #tpu.memory_space<vmem>>, vector<1x128xf32>
    %166 = vector.broadcast %165 : vector<1x128xf32> to vector<64x128xf32>
    %167 = arith.addf %164, %166 : vector<64x128xf32>
    %c0_139 = arith.constant 0 : index
    %c0_140 = arith.constant 0 : index
    %168 = vector.load %arg10[%c0_139, %c0_140] : memref<64x128xf32, #tpu.memory_space<vmem>>, vector<64x128xf32>
    tpu.vector_store %arg10[%c0_139, %c0_140], %167 {strides = array<i32>} : memref<64x128xf32, #tpu.memory_space<vmem>>, vector<64x128xf32>,
    %c0_141 = arith.constant 0 : index
    %c0_142 = arith.constant 0 : index
    %169 = vector.load %arg12[%c0_141, %c0_142] : memref<16x128xf32, #tpu.memory_space<vmem>>, vector<16x128xf32>
    %c0_143 = arith.constant 0 : index
    %c0_144 = arith.constant 0 : index
    %170 = vector.load %arg11[%c0_143, %c0_144] : memref<16x128xf32, #tpu.memory_space<vmem>>, vector<16x128xf32>
    tpu.vector_store %arg11[%c0_143, %c0_144], %169 {strides = array<i32>} : memref<16x128xf32, #tpu.memory_space<vmem>>, vector<16x128xf32>,
    return
  }
  func.func @transform_0(%arg0: i32) -> (i32, i32) {
    %c0_i32 = arith.constant 0 : i32
    %c0_i32_0 = arith.constant 0 : i32
    %c0_i32_1 = arith.constant 0 : i32
    return %c0_i32, %c0_i32_0 : i32, i32
  }
  func.func @transform_1(%arg0: i32) -> (i32, i32) {
    %c0_i32 = arith.constant 0 : i32
    %c0_i32_0 = arith.constant 0 : i32
    %c0_i32_1 = arith.constant 0 : i32
    return %c0_i32, %c0_i32_0 : i32, i32
  }
  func.func @transform_2(%arg0: i32) -> (i32, i32) {
    %c0_i32 = arith.constant 0 : i32
    %c0_i32_0 = arith.constant 0 : i32
    %c0_i32_1 = arith.constant 0 : i32
    return %c0_i32, %c0_i32_0 : i32, i32
  }
  func.func @transform_3(%arg0: i32) -> (i32, i32) {
    %c0_i32 = arith.constant 0 : i32
    %c0_i32_0 = arith.constant 0 : i32
    %c0_i32_1 = arith.constant 0 : i32
    return %c0_i32, %c0_i32_0 : i32, i32
  }
  func.func @transform_4(%arg0: i32) -> (i32, i32, i32) {
    %c0_i32 = arith.constant 0 : i32
    %c0_i32_0 = arith.constant 0 : i32
    %c0_i32_1 = arith.constant 0 : i32
    %c0_i32_2 = arith.constant 0 : i32
    return %c0_i32, %c0_i32_0, %c0_i32_1 : i32, i32, i32
  }
  func.func @transform_5(%arg0: i32) -> (i32, i32, i32) {
    %c0_i32 = arith.constant 0 : i32
    %c0_i32_0 = arith.constant 0 : i32
    %c0_i32_1 = arith.constant 0 : i32
    %c0_i32_2 = arith.constant 0 : i32
    return %c0_i32, %c0_i32_0, %c0_i32_1 : i32, i32, i32
  }
  func.func @transform_6(%arg0: i32) -> (i32, i32, i32) {
    %c0_i32 = arith.constant 0 : i32
    %c0_i32_0 = arith.constant 0 : i32
    %c0_i32_1 = arith.constant 0 : i32
    %c0_i32_2 = arith.constant 0 : i32
    return %c0_i32, %c0_i32_0, %c0_i32_1 : i32, i32, i32
  }
  func.func @transform_7(%arg0: i32) -> (i32, i32) {
    %c0_i32 = arith.constant 0 : i32
    %c0_i32_0 = arith.constant 0 : i32
    %c0_i32_1 = arith.constant 0 : i32
    return %c0_i32, %c0_i32_0 : i32, i32
  }
  func.func @transform_8(%arg0: i32) -> (i32, i32) {
    %c0_i32 = arith.constant 0 : i32
    %c0_i32_0 = arith.constant 0 : i32
    %c0_i32_1 = arith.constant 0 : i32
    return %c0_i32, %c0_i32_0 : i32, i32
  }
  func.func @transform_9(%arg0: i32) -> (i32, i32) {
    %c0_i32 = arith.constant 0 : i32
    %c0_i32_0 = arith.constant 0 : i32
    %c0_i32_1 = arith.constant 0 : i32
    return %c0_i32, %c0_i32_0 : i32, i32
  }
  func.func @transform_10(%arg0: i32) -> (i32, i32) {
    %c0_i32 = arith.constant 0 : i32
    %c0_i32_0 = arith.constant 0 : i32
    %c0_i32_1 = arith.constant 0 : i32
    return %c0_i32, %c0_i32_0 : i32, i32
  }
}

</mosaic_0001>

<llo_original>
// kernel: tpu_custom_call.1
$region0: #{tpu_custom_call.1}
  #allocation0 [shape = 'u32[]', space=smem, size = 0x4, offset = 0x4, fixed_abs, tag = 'smem constant byte address 0x4 - core index']
  #allocation1 [shape = 'u32[144,128]{1,0:T(1,128)}', space=vmem, size = 0x12000, scoped, tag = 'internal scratch']
  #allocation2 [shape = 'f32[16,128]{1,0:T(8,128)}', space=vmem, size = 0x2000, scoped, tag = 'scratch operand']
  #allocation3 [shape = 'f32[64,128]{1,0:T(8,128)}', space=vmem, size = 0x8000, scoped, tag = 'scratch operand']
  #allocation4 [shape = 'f32[64,128]{1,0:T(8,128)}', space=vmem, size = 0x8000, scoped, tag = 'scratch operand']
  %s0 = inlined_call_operand.vmem [shape: f32[64,16], index: 0, kind: input, shape index: {}]
  %s1 = inlined_call_operand.vmem [shape: f32[16,128], index: 1, kind: input, shape index: {}]
  %s2 = inlined_call_operand.hbm [shape: f32[128,128], index: 2, kind: input, shape index: {}]
  %s3 = inlined_call_operand.vmem [shape: f32[1,128], index: 3, kind: input, shape index: {}]
  %s4 = inlined_call_operand.hbm [shape: f32[1,128,128], index: 4, kind: input, shape index: {}]
  %s5 = inlined_call_operand.hbm [shape: f32[1,128,128], index: 5, kind: input, shape index: {}]
  %s6 = inlined_call_operand.vmem [shape: f32[1,1,128], index: 6, kind: input, shape index: {}]
  %s7 = inlined_call_operand.hbm [shape: f32[128,128], index: 7, kind: input, shape index: {}]
  %s8 = inlined_call_operand.vmem [shape: f32[1,128], index: 8, kind: input, shape index: {}]
  %s9 = inlined_call_operand.hbm [shape: f32[64,128], index: 9, kind: output, shape index: {0}]
  %s10 = inlined_call_operand.hbm [shape: f32[16,128], index: 10, kind: output, shape index: {1}]
  %11 = xla_tuple %s9, %s10
  %s12 = sld [smem:[#allocation0]]
  $region70: #{tpu_custom_call.1} parent=0
    _
  %s14 = ssub.s32 1, %s12
  %s15 = scalar_select 0, %s14, %s12
  $region1: #{tpu_custom_call.1} parent=0
    #allocation5 [shape = 'u8[65536]{0}', space=vmem, size = 0x10000, scoped, tag = 'input window, operand 2, single buffered']
    #allocation6 [shape = 's32[1]{0}', space=sflag, size = 0x4, scoped, tag = 'scoped memory for tpu_custom_call.1']
    #allocation7 [shape = 's32[1]{0}', space=sflag, size = 0x4, scoped, tag = 'scoped memory for tpu_custom_call.1']
    #allocation8 [shape = 'u8[65536]{0}', space=vmem, size = 0x10000, scoped, tag = 'input window, operand 4, single buffered']
    #allocation9 [shape = 's32[1]{0}', space=sflag, size = 0x4, scoped, tag = 'scoped memory for tpu_custom_call.1']
    #allocation10 [shape = 'u8[65536]{0}', space=vmem, size = 0x10000, scoped, tag = 'input window, operand 5, single buffered']
    #allocation11 [shape = 'u8[65536]{0}', space=vmem, size = 0x10000, scoped, tag = 'input window, operand 7, single buffered']
    #allocation12 [shape = 's32[1]{0}', space=sflag, size = 0x4, scoped, tag = 'scoped memory for tpu_custom_call.1']
    #allocation13 [shape = 'u8[32768]{0}', space=vmem, size = 0x8000, scoped, tag = 'output window, operand 0, single buffered']
    #allocation14 [shape = 'u8[8192]{0}', space=vmem, size = 0x2000, scoped, tag = 'output window, operand 1, single buffered']
    #allocation15 [shape = 's32[1]{0}', space=sflag, size = 0x4, scoped, tag = 'scoped memory for tpu_custom_call.1']
    %16 = vsyncpa [#allocation6], 0
    %17 = vsyncpa [#allocation9], 0
    %18 = vsyncpa [#allocation12], 0
    %19 = vsyncpa [#allocation7], 0
    %20 = vsyncpa [#allocation15], 0
    // Predicated region
    $region2: #{tpu_custom_call.1} parent=1 // pred_check
      _
    $region3: #{tpu_custom_call.1} parent=1 // pred_check_branch
      %22 = sbr.rel (0) target = $region5
    $region4: #{tpu_custom_call.1} parent=1 // pred_region
      _
    $region5: #{tpu_custom_call.1} parent=1 // pred_fallthru
      _
    // Predicated region
    $region6: #{tpu_custom_call.1} parent=1 // pred_check
      _
    $region7: #{tpu_custom_call.1} parent=1 // pred_check_branch
      %24 = sbr.rel (0) target = $region9
    $region8: #{tpu_custom_call.1} parent=1 // pred_region
      _
    $region9: #{tpu_custom_call.1} parent=1 // pred_fallthru
      _
    // Predicated region
    $region10: #{tpu_custom_call.1} parent=1 // pred_check
      _
    $region11: #{tpu_custom_call.1} parent=1 // pred_check_branch
      %26 = sbr.rel (0) target = $region13
    $region12: #{tpu_custom_call.1} parent=1 // pred_region
      %s28 = ssub.s32 2048, 2048
      %29 = vsyncadd [#allocation6], %s28
      %s30 = sshll.u32 [#allocation5], 4
      %s31 = int_to_ptr.vmem [resolvable:$true] %s30
      %36 = dma.hbm_to_vmem [thread:$0]  %s2, 2048, %s31, [#allocation6], 128, 128, 8
    $region13: #{tpu_custom_call.1} parent=1 // pred_fallthru
      _
    // Predicated region
    $region14: #{tpu_custom_call.1} parent=1 // pred_check
      _
    $region15: #{tpu_custom_call.1} parent=1 // pred_check_branch
      %38 = sbr.rel (0) target = $region17
    $region16: #{tpu_custom_call.1} parent=1 // pred_region
      _
    $region17: #{tpu_custom_call.1} parent=1 // pred_fallthru
      _
    // Predicated region
    $region18: #{tpu_custom_call.1} parent=1 // pred_check
      _
    $region19: #{tpu_custom_call.1} parent=1 // pred_check_branch
      %40 = sbr.rel (0) target = $region21
    $region20: #{tpu_custom_call.1} parent=1 // pred_region
      %s42 = ssub.s32 2048, 2048
      %43 = vsyncadd [#allocation9], %s42
      %s44 = sshll.u32 [#allocation8], 4
      %s45 = int_to_ptr.vmem [resolvable:$true] %s44
      %50 = dma.hbm_to_vmem [thread:$0]  %s4, 2048, %s45, [#allocation9], 128, 128, 8
    $region21: #{tpu_custom_call.1} parent=1 // pred_fallthru
      _
    // Predicated region
    $region22: #{tpu_custom_call.1} parent=1 // pred_check
      _
    $region23: #{tpu_custom_call.1} parent=1 // pred_check_branch
      %52 = sbr.rel (0) target = $region25
    $region24: #{tpu_custom_call.1} parent=1 // pred_region
      %s54 = ssub.s32 2048, 2048
      %55 = vsyncadd [#allocation9], %s54
      %s56 = sshll.u32 [#allocation10], 4
      %s57 = int_to_ptr.vmem [resolvable:$true] %s56
      %62 = dma.hbm_to_vmem [thread:$0]  %s5, 2048, %s57, [#allocation9], 128, 128, 8
    $region25: #{tpu_custom_call.1} parent=1 // pred_fallthru
      _
    // Predicated region
    $region26: #{tpu_custom_call.1} parent=1 // pred_check
      _
    $region27: #{tpu_custom_call.1} parent=1 // pred_check_branch
      %64 = sbr.rel (0) target = $region29
    $region28: #{tpu_custom_call.1} parent=1 // pred_region
      _
    $region29: #{tpu_custom_call.1} parent=1 // pred_fallthru
      _
    // Predicated region
    $region30: #{tpu_custom_call.1} parent=1 // pred_check
      _
    $region31: #{tpu_custom_call.1} parent=1 // pred_check_branch
      %66 = sbr.rel (0) target = $region33
    $region32: #{tpu_custom_call.1} parent=1 // pred_region
      %s68 = ssub.s32 2048, 2048
      %69 = vsyncadd [#allocation12], %s68
      %s70 = sshll.u32 [#allocation11], 4
      %s71 = int_to_ptr.vmem [resolvable:$true] %s70
      %76 = dma.hbm_to_vmem [thread:$0]  %s7, 2048, %s71, [#allocation12], 128, 128, 8
    $region33: #{tpu_custom_call.1} parent=1 // pred_fallthru
      _
    // Predicated region
    $region34: #{tpu_custom_call.1} parent=1 // pred_check
      _
    $region35: #{tpu_custom_call.1} parent=1 // pred_check_branch
      %78 = sbr.rel (0) target = $region37
    $region36: #{tpu_custom_call.1} parent=1 // pred_region
      _
    $region37: #{tpu_custom_call.1} parent=1 // pred_fallthru
      _
    // Predicated region
    $region38: #{tpu_custom_call.1} parent=1 // pred_check
      _
    $region39: #{tpu_custom_call.1} parent=1 // pred_check_branch
      %80 = sbr.rel (0) target = $region41
    $region40: #{tpu_custom_call.1} parent=1 // pred_region
      %81 = dma.done [#allocation6], 2048
    $region41: #{tpu_custom_call.1} parent=1 // pred_fallthru
      _
    // Predicated region
    $region42: #{tpu_custom_call.1} parent=1 // pred_check
      _
    $region43: #{tpu_custom_call.1} parent=1 // pred_check_branch
      %83 = sbr.rel (0) target = $region45
    $region44: #{tpu_custom_call.1} parent=1 // pred_region
      %84 = dma.done [#allocation9], 2048
    $region45: #{tpu_custom_call.1} parent=1 // pred_fallthru
      _
    // Predicated region
    $region46: #{tpu_custom_call.1} parent=1 // pred_check
      _
    $region47: #{tpu_custom_call.1} parent=1 // pred_check_branch
      %86 = sbr.rel (0) target = $region49
    $region48: #{tpu_custom_call.1} parent=1 // pred_region
      %87 = dma.done [#allocation9], 2048
    $region49: #{tpu_custom_call.1} parent=1 // pred_fallthru
      _
    // Predicated region
    $region50: #{tpu_custom_call.1} parent=1 // pred_check
      _
    $region51: #{tpu_custom_call.1} parent=1 // pred_check_branch
      %89 = sbr.rel (0) target = $region53
    $region52: #{tpu_custom_call.1} parent=1 // pred_region
      %90 = dma.done [#allocation12], 2048
    $region53: #{tpu_custom_call.1} parent=1 // pred_fallthru
      _
    %v91 = vld [vmem:[%s0] sm:$0xff]
    %v92 = vld [vmem:[%s0 + $0x8] sm:$0xff]
    %v93 = vld [vmem:[%s0 + $0x10] sm:$0xff]
    %v94 = vld [vmem:[%s0 + $0x18] sm:$0xff]
    %v95 = vld [vmem:[%s0 + $0x20] sm:$0xff]
    %v96 = vld [vmem:[%s0 + $0x28] sm:$0xff]
    %v97 = vld [vmem:[%s0 + $0x30] sm:$0xff]
    %v98 = vld [vmem:[%s0 + $0x38] sm:$0xff]
    %v99 = vld [vmem:[%s1] sm:$0xff]
    %v100 = vld [vmem:[%s1 + $0x8] sm:$0xff]
    %v101 = vld [vmem:[%s3] sm:$0x1]
    %v103 = vlaneseq
    %v104 = vshrl.u32 %v103, 7
    %v105 = vsub.s32 0, %v104
    %v106 = vrot.slane %v101, %v105
    %vm108 = vcmask 130048
    %v110 = vsel %vm108, %v91, 0
    %v113 = vsel %vm108, %v92, 0
    %v116 = vsel %vm108, %v93, 0
    %v119 = vsel %vm108, %v94, 0
    %v122 = vsel %vm108, %v95, 0
    %v125 = vsel %vm108, %v96, 0
    %v128 = vsel %vm108, %v97, 0
    %v131 = vsel %vm108, %v98, 0
    %133 = vmatprep.subr.mxu0 0.0
    %134 = vmatpush1.msra.mxu0 %v99
    %135 = vmatprep.subr.mxu0 0.0
    %136 = vmatpush1.msra.mxu0 %v100
    %137 = vmatprep.subr.mxu0 0.0
    %138 = vmatpush1.msra.mxu0 0.0
    %139 = vmatprep.subr.mxu0 0.0
    %140 = vmatpush1.msra.mxu0 0.0
    %141 = vmatprep.subr.mxu0 0.0
    %142 = vmatpush1.msra.mxu0 0.0
    %143 = vmatprep.subr.mxu0 0.0
    %144 = vmatpush1.msra.mxu0 0.0
    %145 = vmatprep.subr.mxu0 0.0
    %146 = vmatpush1.msra.mxu0 0.0
    %147 = vmatprep.subr.mxu0 0.0
    %148 = vmatpush1.msra.mxu0 0.0
    %149 = vmatprep.subr.mxu0 0.0
    %150 = vmatpush1.msra.mxu0 0.0
    %151 = vmatprep.subr.mxu0 0.0
    %152 = vmatpush1.msra.mxu0 0.0
    %153 = vmatprep.subr.mxu0 0.0
    %154 = vmatpush1.msra.mxu0 0.0
    %155 = vmatprep.subr.mxu0 0.0
    %156 = vmatpush1.msra.mxu0 0.0
    %157 = vmatprep.subr.mxu0 0.0
    %158 = vmatpush1.msra.mxu0 0.0
    %159 = vmatprep.subr.mxu0 0.0
    %160 = vmatpush1.msra.mxu0 0.0
    %161 = vmatprep.subr.mxu0 0.0
    %162 = vmatpush1.msra.mxu0 0.0
    %163 = vmatprep.subr.mxu0 0.0
    %164 = vmatpush1.msra.mxu0 0.0
    %165 = vmatprep.subr.mxu0 0.0
    %166 = vmatpush1.msra.mxu0 0.0
    %167 = vmatprep.subr.mxu0 0.0
    %168 = vmatpush1.msra.mxu0 0.0
    %169 = vmatprep.subr.mxu0 0.0
    %170 = vmatpush1.msra.mxu0 0.0
    %171 = vmatprep.subr.mxu0 0.0
    %172 = vmatpush1.msra.mxu0 0.0
    %173 = vmatprep.subr.mxu0 0.0
    %174 = vmatpush1.msra.mxu0 0.0
    %175 = vmatprep.subr.mxu0 0.0
    %176 = vmatpush1.msra.mxu0 0.0
    %177 = vmatprep.subr.mxu0 0.0
    %178 = vmatpush1.msra.mxu0 0.0
    %179 = vmatprep.subr.mxu0 0.0
    %180 = vmatpush1.msra.mxu0 0.0
    %181 = vmatprep.subr.mxu0 0.0
    %182 = vmatpush1.msra.mxu0 0.0
    %183 = vmatprep.subr.mxu0 0.0
    %184 = vmatpush1.msra.mxu0 0.0
    %185 = vmatprep.subr.mxu0 0.0
    %186 = vmatpush1.msra.mxu0 0.0
    %187 = vmatprep.subr.mxu0 0.0
    %188 = vmatpush1.msra.mxu0 0.0
    %189 = vmatprep.subr.mxu0 0.0
    %190 = vmatpush1.msra.mxu0 0.0
    %191 = vmatprep.subr.mxu0 0.0
    %192 = vmatpush1.msra.mxu0 0.0
    %193 = vmatprep.subr.mxu0 0.0
    %194 = vmatpush1.msra.mxu0 0.0
    %195 = vmatprep.subr.mxu0 0.0
    %196 = vmatpush1.msra.mxu0 0.0
    %197 = vmatprep.mubr.f32.mxu0 0.0
    %198 = vmatmul.mubr.f32.gmra.mrb[0].mxu0 %v110
    %v199 = vpop.f32.mrb[0].mxu0
    %v200 = vadd.f32 %v106, %v199
    %v201 = vpop.f32.mrb[0].mxu0
    %202 = vmatprep.mubr.f32.mxu0 0.0
    %203 = vmatmul.mubr.f32.gmra.mrb[0].mxu0 %v113
    %v204 = vpop.f32.mrb[0].mxu0
    %v205 = vadd.f32 %v106, %v204
    %v206 = vpop.f32.mrb[0].mxu0
    %207 = vmatprep.mubr.f32.mxu0 0.0
    %208 = vmatmul.mubr.f32.gmra.mrb[0].mxu0 %v116
    %v209 = vpop.f32.mrb[0].mxu0
    %v210 = vadd.f32 %v106, %v209
    %v211 = vpop.f32.mrb[0].mxu0
    %212 = vmatprep.mubr.f32.mxu0 0.0
    %213 = vmatmul.mubr.f32.gmra.mrb[0].mxu0 %v119
    %v214 = vpop.f32.mrb[0].mxu0
    %v215 = vadd.f32 %v106, %v214
    %v216 = vpop.f32.mrb[0].mxu0
    %217 = vmatprep.mubr.f32.mxu0 0.0
    %218 = vmatmul.mubr.f32.gmra.mrb[0].mxu0 %v122
    %v219 = vpop.f32.mrb[0].mxu0
    %v220 = vadd.f32 %v106, %v219
    %v221 = vpop.f32.mrb[0].mxu0
    %222 = vmatprep.mubr.f32.mxu0 0.0
    %223 = vmatmul.mubr.f32.gmra.mrb[0].mxu0 %v125
    %v224 = vpop.f32.mrb[0].mxu0
    %v225 = vadd.f32 %v106, %v224
    %v226 = vpop.f32.mrb[0].mxu0
    %227 = vmatprep.mubr.f32.mxu0 0.0
    %228 = vmatmul.mubr.f32.gmra.mrb[0].mxu0 %v128
    %v229 = vpop.f32.mrb[0].mxu0
    %v230 = vadd.f32 %v106, %v229
    %v231 = vpop.f32.mrb[0].mxu0
    %232 = vmatprep.mubr.f32.mxu0 0.0
    %233 = vmatmul.mubr.f32.gmra.mrb[0].mxu0 %v131
    %v234 = vpop.f32.mrb[0].mxu0
    %v235 = vadd.f32 %v106, %v234
    %v236 = vpop.f32.mrb[0].mxu0
    %237 = vdwg.mxu0
    %238 = vst [vmem:[#allocation3] sm:$0xff] %v200
    %239 = vst [vmem:[#allocation3 + $0x8] sm:$0xff] %v205
    %240 = vst [vmem:[#allocation3 + $0x10] sm:$0xff] %v210
    %241 = vst [vmem:[#allocation3 + $0x18] sm:$0xff] %v215
    %242 = vst [vmem:[#allocation3 + $0x20] sm:$0xff] %v220
    %243 = vst [vmem:[#allocation3 + $0x28] sm:$0xff] %v225
    %244 = vst [vmem:[#allocation3 + $0x30] sm:$0xff] %v230
    %245 = vst [vmem:[#allocation3 + $0x38] sm:$0xff] %v235
    %246 = vst [vmem:[#allocation2] sm:$0xff] 0.0
    %247 = vst [vmem:[#allocation2 + $0x8] sm:$0xff] 0.0
    %v248 = vld [vmem:[#allocation5] sm:$0xff]
    %v249 = vld [vmem:[#allocation5 + $0x8] sm:$0xff]
    %v250 = vld [vmem:[#allocation5 + $0x10] sm:$0xff]
    %v251 = vld [vmem:[#allocation5 + $0x18] sm:$0xff]
    %v252 = vld [vmem:[#allocation5 + $0x20] sm:$0xff]
    %v253 = vld [vmem:[#allocation5 + $0x28] sm:$0xff]
    %v254 = vld [vmem:[#allocation5 + $0x30] sm:$0xff]
    %v255 = vld [vmem:[#allocation5 + $0x38] sm:$0xff]
    %v256 = vld [vmem:[#allocation5 + $0x40] sm:$0xff]
    %v257 = vld [vmem:[#allocation5 + $0x48] sm:$0xff]
    %v258 = vld [vmem:[#allocation5 + $0x50] sm:$0xff]
    %v259 = vld [vmem:[#allocation5 + $0x58] sm:$0xff]
    %v260 = vld [vmem:[#allocation5 + $0x60] sm:$0xff]
    %v261 = vld [vmem:[#allocation5 + $0x68] sm:$0xff]
    %v262 = vld [vmem:[#allocation5 + $0x70] sm:$0xff]
    %v263 = vld [vmem:[#allocation5 + $0x78] sm:$0xff]
    %v264 = vld [vmem:[#allocation8] sm:$0xff]
    %v265 = vld [vmem:[#allocation8 + $0x8] sm:$0xff]
    %v266 = vld [vmem:[#allocation8 + $0x10] sm:$0xff]
    %v267 = vld [vmem:[#allocation8 + $0x18] sm:$0xff]
    %v268 = vld [vmem:[#allocation8 + $0x20] sm:$0xff]
    %v269 = vld [vmem:[#allocation8 + $0x28] sm:$0xff]
    %v270 = vld [vmem:[#allocation8 + $0x30] sm:$0xff]
    %v271 = vld [vmem:[#allocation8 + $0x38] sm:$0xff]
    %v272 = vld [vmem:[#allocation8 + $0x40] sm:$0xff]
    %v273 = vld [vmem:[#allocation8 + $0x48] sm:$0xff]
    %v274 = vld [vmem:[#allocation8 + $0x50] sm:$0xff]
    %v275 = vld [vmem:[#allocation8 + $0x58] sm:$0xff]
    %v276 = vld [vmem:[#allocation8 + $0x60] sm:$0xff]
    %v277 = vld [vmem:[#allocation8 + $0x68] sm:$0xff]
    %v278 = vld [vmem:[#allocation8 + $0x70] sm:$0xff]
    %v279 = vld [vmem:[#allocation8 + $0x78] sm:$0xff]
    %v280 = vld [vmem:[#allocation10] sm:$0xff]
    %v281 = vld [vmem:[#allocation10 + $0x8] sm:$0xff]
    %v282 = vld [vmem:[#allocation10 + $0x10] sm:$0xff]
    %v283 = vld [vmem:[#allocation10 + $0x18] sm:$0xff]
    %v284 = vld [vmem:[#allocation10 + $0x20] sm:$0xff]
    %v285 = vld [vmem:[#allocation10 + $0x28] sm:$0xff]
    %v286 = vld [vmem:[#allocation10 + $0x30] sm:$0xff]
    %v287 = vld [vmem:[#allocation10 + $0x38] sm:$0xff]
    %v288 = vld [vmem:[#allocation10 + $0x40] sm:$0xff]
    %v289 = vld [vmem:[#allocation10 + $0x48] sm:$0xff]
    %v290 = vld [vmem:[#allocation10 + $0x50] sm:$0xff]
    %v291 = vld [vmem:[#allocation10 + $0x58] sm:$0xff]
    %v292 = vld [vmem:[#allocation10 + $0x60] sm:$0xff]
    %v293 = vld [vmem:[#allocation10 + $0x68] sm:$0xff]
    %v294 = vld [vmem:[#allocation10 + $0x70] sm:$0xff]
    %v295 = vld [vmem:[#allocation10 + $0x78] sm:$0xff]
    %v296 = vld [vmem:[%s6] sm:$0x1]
    %v298 = vlaneseq
    %v299 = vshrl.u32 %v298, 7
    %v300 = vsub.s32 0, %v299
    %v301 = vrot.slane %v296, %v300
    %v303 = vld [vmem:[#allocation3] sm:$0xff]
    %v304 = vld [vmem:[#allocation2] sm:$0xff]
    %305 = vmatprep.subr.mxu0 0.0
    %306 = vmatpush1.msra.mxu0 %v248
    %307 = vmatprep.subr.mxu0 0.0
    %308 = vmatpush1.msra.mxu0 %v249
    %309 = vmatprep.subr.mxu0 0.0
    %310 = vmatpush1.msra.mxu0 %v250
    %311 = vmatprep.subr.mxu0 0.0
    %312 = vmatpush1.msra.mxu0 %v251
    %313 = vmatprep.subr.mxu0 0.0
    %314 = vmatpush1.msra.mxu0 %v252
    %315 = vmatprep.subr.mxu0 0.0
    %316 = vmatpush1.msra.mxu0 %v253
    %317 = vmatprep.subr.mxu0 0.0
    %318 = vmatpush1.msra.mxu0 %v254
    %319 = vmatprep.subr.mxu0 0.0
    %320 = vmatpush1.msra.mxu0 %v255
    %321 = vmatprep.subr.mxu0 0.0
    %322 = vmatpush1.msra.mxu0 %v256
    %323 = vmatprep.subr.mxu0 0.0
    %324 = vmatpush1.msra.mxu0 %v257
    %325 = vmatprep.subr.mxu0 0.0
    %326 = vmatpush1.msra.mxu0 %v258
    %327 = vmatprep.subr.mxu0 0.0
    %328 = vmatpush1.msra.mxu0 %v259
    %329 = vmatprep.subr.mxu0 0.0
    %330 = vmatpush1.msra.mxu0 %v260
    %331 = vmatprep.subr.mxu0 0.0
    %332 = vmatpush1.msra.mxu0 %v261
    %333 = vmatprep.subr.mxu0 0.0
    %334 = vmatpush1.msra.mxu0 %v262
    %335 = vmatprep.subr.mxu0 0.0
    %336 = vmatpush1.msra.mxu0 %v263
    %337 = vmatprep.subr.mxu0 0.0
    %338 = vmatpush1.msra.mxu0 0.0
    %339 = vmatprep.subr.mxu0 0.0
    %340 = vmatpush1.msra.mxu0 0.0
    %341 = vmatprep.subr.mxu0 0.0
    %342 = vmatpush1.msra.mxu0 0.0
    %343 = vmatprep.subr.mxu0 0.0
    %344 = vmatpush1.msra.mxu0 0.0
    %345 = vmatprep.subr.mxu0 0.0
    %346 = vmatpush1.msra.mxu0 0.0
    %347 = vmatprep.subr.mxu0 0.0
    %348 = vmatpush1.msra.mxu0 0.0
    %349 = vmatprep.subr.mxu0 0.0
    %350 = vmatpush1.msra.mxu0 0.0
    %351 = vmatprep.subr.mxu0 0.0
    %352 = vmatpush1.msra.mxu0 0.0
    %353 = vmatprep.subr.mxu0 0.0
    %354 = vmatpush1.msra.mxu0 0.0
    %355 = vmatprep.subr.mxu0 0.0
    %356 = vmatpush1.msra.mxu0 0.0
    %357 = vmatprep.subr.mxu0 0.0
    %358 = vmatpush1.msra.mxu0 0.0
    %359 = vmatprep.subr.mxu0 0.0
    %360 = vmatpush1.msra.mxu0 0.0
    %361 = vmatprep.subr.mxu0 0.0
    %362 = vmatpush1.msra.mxu0 0.0
    %363 = vmatprep.subr.mxu0 0.0
    %364 = vmatpush1.msra.mxu0 0.0
    %365 = vmatprep.subr.mxu0 0.0
    %366 = vmatpush1.msra.mxu0 0.0
    %367 = vmatprep.subr.mxu0 0.0
    %368 = vmatpush1.msra.mxu0 0.0
    %369 = vmatprep.mubr.f32.mxu0 0.0
    %370 = vmatmul.mubr.f32.gmra.mrb[0].mxu0 %v304
    %v371 = vpop.f32.mrb[0].mxu0
    %v372 = vadd.f32 0.0, %v371
    %v373 = vpop.f32.mrb[0].mxu0
    %374 = vdwg.mxu0
    %v375 = vadd.f32 %v303, %v372
    %v376 = vtanh.pop %v375
    %377 = vst [vmem:[#allocation2] sm:$0xff] %v376
    %v378 = vld [vmem:[#allocation2 + $0x8] sm:$0xff]
    %379 = vmatprep.subr.mxu0 0.0
    %380 = vmatpush1.msra.mxu0 %v280
    %381 = vmatprep.subr.mxu0 0.0
    %382 = vmatpush1.msra.mxu0 %v281
    %383 = vmatprep.subr.mxu0 0.0
    %384 = vmatpush1.msra.mxu0 %v282
    %385 = vmatprep.subr.mxu0 0.0
    %386 = vmatpush1.msra.mxu0 %v283
    %387 = vmatprep.subr.mxu0 0.0
    %388 = vmatpush1.msra.mxu0 %v284
    %389 = vmatprep.subr.mxu0 0.0
    %390 = vmatpush1.msra.mxu0 %v285
    %391 = vmatprep.subr.mxu0 0.0
    %392 = vmatpush1.msra.mxu0 %v286
    %393 = vmatprep.subr.mxu0 0.0
    %394 = vmatpush1.msra.mxu0 %v287
    %395 = vmatprep.subr.mxu0 0.0
    %396 = vmatpush1.msra.mxu0 %v288
    %397 = vmatprep.subr.mxu0 0.0
    %398 = vmatpush1.msra.mxu0 %v289
    %399 = vmatprep.subr.mxu0 0.0
    %400 = vmatpush1.msra.mxu0 %v290
    %401 = vmatprep.subr.mxu0 0.0
    %402 = vmatpush1.msra.mxu0 %v291
    %403 = vmatprep.subr.mxu0 0.0
    %404 = vmatpush1.msra.mxu0 %v292
    %405 = vmatprep.subr.mxu0 0.0
    %406 = vmatpush1.msra.mxu0 %v293
    %407 = vmatprep.subr.mxu0 0.0
    %408 = vmatpush1.msra.mxu0 %v294
    %409 = vmatprep.subr.mxu0 0.0
    %410 = vmatpush1.msra.mxu0 %v295
    %411 = vmatprep.subr.mxu0 0.0
    %412 = vmatpush1.msra.mxu0 0.0
    %413 = vmatprep.subr.mxu0 0.0
    %414 = vmatpush1.msra.mxu0 0.0
    %415 = vmatprep.subr.mxu0 0.0
    %416 = vmatpush1.msra.mxu0 0.0
    %417 = vmatprep.subr.mxu0 0.0
    %418 = vmatpush1.msra.mxu0 0.0
    %419 = vmatprep.subr.mxu0 0.0
    %420 = vmatpush1.msra.mxu0 0.0
    %421 = vmatprep.subr.mxu0 0.0
    %422 = vmatpush1.msra.mxu0 0.0
    %423 = vmatprep.subr.mxu0 0.0
    %424 = vmatpush1.msra.mxu0 0.0
    %425 = vmatprep.subr.mxu0 0.0
    %426 = vmatpush1.msra.mxu0 0.0
    %427 = vmatprep.subr.mxu0 0.0
    %428 = vmatpush1.msra.mxu0 0.0
    %429 = vmatprep.subr.mxu0 0.0
    %430 = vmatpush1.msra.mxu0 0.0
    %431 = vmatprep.subr.mxu0 0.0
    %432 = vmatpush1.msra.mxu0 0.0
    %433 = vmatprep.subr.mxu0 0.0
    %434 = vmatpush1.msra.mxu0 0.0
    %435 = vmatprep.subr.mxu0 0.0
    %436 = vmatpush1.msra.mxu0 0.0
    %437 = vmatprep.subr.mxu0 0.0
    %438 = vmatpush1.msra.mxu0 0.0
    %439 = vmatprep.subr.mxu0 0.0
    %440 = vmatpush1.msra.mxu0 0.0
    %441 = vmatprep.subr.mxu0 0.0
    %442 = vmatpush1.msra.mxu0 0.0
    %443 = vmatprep.mubr.f32.mxu0 0.0
    %444 = vmatmul.mubr.f32.gmra.mrb[0].mxu0 %v378
    %v445 = vpop.f32.mrb[0].mxu0
    %v446 = vadd.f32 0.0, %v445
    %v447 = vpop.f32.mrb[0].mxu0
    %448 = vdwg.mxu0
    %449 = vmatprep.subr.mxu0 0.0
    %450 = vmatpush1.msra.mxu0 %v264
    %451 = vmatprep.subr.mxu0 0.0
    %452 = vmatpush1.msra.mxu0 %v265
    %453 = vmatprep.subr.mxu0 0.0
    %454 = vmatpush1.msra.mxu0 %v266
    %455 = vmatprep.subr.mxu0 0.0
    %456 = vmatpush1.msra.mxu0 %v267
    %457 = vmatprep.subr.mxu0 0.0
    %458 = vmatpush1.msra.mxu0 %v268
    %459 = vmatprep.subr.mxu0 0.0
    %460 = vmatpush1.msra.mxu0 %v269
    %461 = vmatprep.subr.mxu0 0.0
    %462 = vmatpush1.msra.mxu0 %v270
    %463 = vmatprep.subr.mxu0 0.0
    %464 = vmatpush1.msra.mxu0 %v271
    %465 = vmatprep.subr.mxu0 0.0
    %466 = vmatpush1.msra.mxu0 %v272
    %467 = vmatprep.subr.mxu0 0.0
    %468 = vmatpush1.msra.mxu0 %v273
    %469 = vmatprep.subr.mxu0 0.0
    %470 = vmatpush1.msra.mxu0 %v274
    %471 = vmatprep.subr.mxu0 0.0
    %472 = vmatpush1.msra.mxu0 %v275
    %473 = vmatprep.subr.mxu0 0.0
    %474 = vmatpush1.msra.mxu0 %v276
    %475 = vmatprep.subr.mxu0 0.0
    %476 = vmatpush1.msra.mxu0 %v277
    %477 = vmatprep.subr.mxu0 0.0
    %478 = vmatpush1.msra.mxu0 %v278
    %479 = vmatprep.subr.mxu0 0.0
    %480 = vmatpush1.msra.mxu0 %v279
    %481 = vmatprep.subr.mxu0 0.0
    %482 = vmatpush1.msra.mxu0 0.0
    %483 = vmatprep.subr.mxu0 0.0
    %484 = vmatpush1.msra.mxu0 0.0
    %485 = vmatprep.subr.mxu0 0.0
    %486 = vmatpush1.msra.mxu0 0.0
    %487 = vmatprep.subr.mxu0 0.0
    %488 = vmatpush1.msra.mxu0 0.0
    %489 = vmatprep.subr.mxu0 0.0
    %490 = vmatpush1.msra.mxu0 0.0
    %491 = vmatprep.subr.mxu0 0.0
    %492 = vmatpush1.msra.mxu0 0.0
    %493 = vmatprep.subr.mxu0 0.0
    %494 = vmatpush1.msra.mxu0 0.0
    %495 = vmatprep.subr.mxu0 0.0
    %496 = vmatpush1.msra.mxu0 0.0
    %497 = vmatprep.subr.mxu0 0.0
    %498 = vmatpush1.msra.mxu0 0.0
    %499 = vmatprep.subr.mxu0 0.0
    %500 = vmatpush1.msra.mxu0 0.0
    %501 = vmatprep.subr.mxu0 0.0
    %502 = vmatpush1.msra.mxu0 0.0
    %503 = vmatprep.subr.mxu0 0.0
    %504 = vmatpush1.msra.mxu0 0.0
    %505 = vmatprep.subr.mxu0 0.0
    %506 = vmatpush1.msra.mxu0 0.0
    %507 = vmatprep.subr.mxu0 0.0
    %508 = vmatpush1.msra.mxu0 0.0
    %509 = vmatprep.subr.mxu0 0.0
    %510 = vmatpush1.msra.mxu0 0.0
    %511 = vmatprep.subr.mxu0 0.0
    %512 = vmatpush1.msra.mxu0 0.0
    %513 = vmatprep.mubr.f32.mxu0 0.0
    %514 = vmatmul.mubr.f32.gmra.mrb[0].mxu0 %v376
    %v515 = vpop.f32.mrb[0].mxu0
    %v516 = vadd.f32 %v446, %v515
    %v517 = vpop.f32.mrb[0].mxu0
    %518 = vdwg.mxu0
    %v519 = vadd.f32 %v516, %v301
    %v520 = vtanh.pop %v519
    %521 = vst [vmem:[#allocation2 + $0x8] sm:$0xff] %v520
    %522 = vst [vmem:[#allocation4] sm:$0xff] %v520
    %s523 = scalar_lea.vmem [#allocation3], 8
    %v524 = vld [vmem:[%s523] sm:$0xff]
    %v525 = vld [vmem:[#allocation2] sm:$0xff]
    %526 = vmatprep.subr.mxu0 0.0
    %527 = vmatpush1.msra.mxu0 %v248
    %528 = vmatprep.subr.mxu0 0.0
    %529 = vmatpush1.msra.mxu0 %v249
    %530 = vmatprep.subr.mxu0 0.0
    %531 = vmatpush1.msra.mxu0 %v250
    %532 = vmatprep.subr.mxu0 0.0
    %533 = vmatpush1.msra.mxu0 %v251
    %534 = vmatprep.subr.mxu0 0.0
    %535 = vmatpush1.msra.mxu0 %v252
    %536 = vmatprep.subr.mxu0 0.0
    %537 = vmatpush1.msra.mxu0 %v253
    %538 = vmatprep.subr.mxu0 0.0
    %539 = vmatpush1.msra.mxu0 %v254
    %540 = vmatprep.subr.mxu0 0.0
    %541 = vmatpush1.msra.mxu0 %v255
    %542 = vmatprep.subr.mxu0 0.0
    %543 = vmatpush1.msra.mxu0 %v256
    %544 = vmatprep.subr.mxu0 0.0
    %545 = vmatpush1.msra.mxu0 %v257
    %546 = vmatprep.subr.mxu0 0.0
    %547 = vmatpush1.msra.mxu0 %v258
    %548 = vmatprep.subr.mxu0 0.0
    %549 = vmatpush1.msra.mxu0 %v259
    %550 = vmatprep.subr.mxu0 0.0
    %551 = vmatpush1.msra.mxu0 %v260
    %552 = vmatprep.subr.mxu0 0.0
    %553 = vmatpush1.msra.mxu0 %v261
    %554 = vmatprep.subr.mxu0 0.0
    %555 = vmatpush1.msra.mxu0 %v262
    %556 = vmatprep.subr.mxu0 0.0
    %557 = vmatpush1.msra.mxu0 %v263
    %558 = vmatprep.subr.mxu0 0.0
    %559 = vmatpush1.msra.mxu0 0.0
    %560 = vmatprep.subr.mxu0 0.0
    %561 = vmatpush1.msra.mxu0 0.0
    %562 = vmatprep.subr.mxu0 0.0
    %563 = vmatpush1.msra.mxu0 0.0
    %564 = vmatprep.subr.mxu0 0.0
    %565 = vmatpush1.msra.mxu0 0.0
    %566 = vmatprep.subr.mxu0 0.0
    %567 = vmatpush1.msra.mxu0 0.0
    %568 = vmatprep.subr.mxu0 0.0
    %569 = vmatpush1.msra.mxu0 0.0
    %570 = vmatprep.subr.mxu0 0.0
    %571 = vmatpush1.msra.mxu0 0.0
    %572 = vmatprep.subr.mxu0 0.0
    %573 = vmatpush1.msra.mxu0 0.0
    %574 = vmatprep.subr.mxu0 0.0
    %575 = vmatpush1.msra.mxu0 0.0
    %576 = vmatprep.subr.mxu0 0.0
    %577 = vmatpush1.msra.mxu0 0.0
    %578 = vmatprep.subr.mxu0 0.0
    %579 = vmatpush1.msra.mxu0 0.0
    %580 = vmatprep.subr.mxu0 0.0
    %581 = vmatpush1.msra.mxu0 0.0
    %582 = vmatprep.subr.mxu0 0.0
    %583 = vmatpush1.msra.mxu0 0.0
    %584 = vmatprep.subr.mxu0 0.0
    %585 = vmatpush1.msra.mxu0 0.0
    %586 = vmatprep.subr.mxu0 0.0
    %587 = vmatpush1.msra.mxu0 0.0
    %588 = vmatprep.subr.mxu0 0.0
    %589 = vmatpush1.msra.mxu0 0.0
    %590 = vmatprep.mubr.f32.mxu0 0.0
    %591 = vmatmul.mubr.f32.gmra.mrb[0].mxu0 %v525
    %v592 = vpop.f32.mrb[0].mxu0
    %v593 = vadd.f32 0.0, %v592
    %v594 = vpop.f32.mrb[0].mxu0
    %595 = vdwg.mxu0
    %v596 = vadd.f32 %v524, %v593
    %v597 = vtanh.pop %v596
    %598 = vst [vmem:[#allocation2] sm:$0xff] %v597
    %v599 = vld [vmem:[#allocation2 + $0x8] sm:$0xff]
    %600 = vmatprep.subr.mxu0 0.0
    %601 = vmatpush1.msra.mxu0 %v280
    %602 = vmatprep.subr.mxu0 0.0
    %603 = vmatpush1.msra.mxu0 %v281
    %604 = vmatprep.subr.mxu0 0.0
    %605 = vmatpush1.msra.mxu0 %v282
    %606 = vmatprep.subr.mxu0 0.0
    %607 = vmatpush1.msra.mxu0 %v283
    %608 = vmatprep.subr.mxu0 0.0
    %609 = vmatpush1.msra.mxu0 %v284
    %610 = vmatprep.subr.mxu0 0.0
    %611 = vmatpush1.msra.mxu0 %v285
    %612 = vmatprep.subr.mxu0 0.0
    %613 = vmatpush1.msra.mxu0 %v286
    %614 = vmatprep.subr.mxu0 0.0
    %615 = vmatpush1.msra.mxu0 %v287
    %616 = vmatprep.subr.mxu0 0.0
    %617 = vmatpush1.msra.mxu0 %v288
    %618 = vmatprep.subr.mxu0 0.0
    %619 = vmatpush1.msra.mxu0 %v289
    %620 = vmatprep.subr.mxu0 0.0
    %621 = vmatpush1.msra.mxu0 %v290
    %622 = vmatprep.subr.mxu0 0.0
    %623 = vmatpush1.msra.mxu0 %v291
    %624 = vmatprep.subr.mxu0 0.0
    %625 = vmatpush1.msra.mxu0 %v292
    %626 = vmatprep.subr.mxu0 0.0
    %627 = vmatpush1.msra.mxu0 %v293
    %628 = vmatprep.subr.mxu0 0.0
    %629 = vmatpush1.msra.mxu0 %v294
    %630 = vmatprep.subr.mxu0 0.0
    %631 = vmatpush1.msra.mxu0 %v295
    %632 = vmatprep.subr.mxu0 0.0
    %633 = vmatpush1.msra.mxu0 0.0
    %634 = vmatprep.subr.mxu0 0.0
    %635 = vmatpush1.msra.mxu0 0.0
    %636 = vmatprep.subr.mxu0 0.0
    %637 = vmatpush1.msra.mxu0 0.0
    %638 = vmatprep.subr.mxu0 0.0
    %639 = vmatpush1.msra.mxu0 0.0
    %640 = vmatprep.subr.mxu0 0.0
    %641 = vmatpush1.msra.mxu0 0.0
    %642 = vmatprep.subr.mxu0 0.0
    %643 = vmatpush1.msra.mxu0 0.0
    %644 = vmatprep.subr.mxu0 0.0
    %645 = vmatpush1.msra.mxu0 0.0
    %646 = vmatprep.subr.mxu0 0.0
    %647 = vmatpush1.msra.mxu0 0.0
    %648 = vmatprep.subr.mxu0 0.0
    %649 = vmatpush1.msra.mxu0 0.0
    %650 = vmatprep.subr.mxu0 0.0
    %651 = vmatpush1.msra.mxu0 0.0
    %652 = vmatprep.subr.mxu0 0.0
    %653 = vmatpush1.msra.mxu0 0.0
    %654 = vmatprep.subr.mxu0 0.0
    %655 = vmatpush1.msra.mxu0 0.0
    %656 = vmatprep.subr.mxu0 0.0
    %657 = vmatpush1.msra.mxu0 0.0
    %658 = vmatprep.subr.mxu0 0.0
    %659 = vmatpush1.msra.mxu0 0.0
    %660 = vmatprep.subr.mxu0 0.0
    %661 = vmatpush1.msra.mxu0 0.0
    %662 = vmatprep.subr.mxu0 0.0
    %663 = vmatpush1.msra.mxu0 0.0
    %664 = vmatprep.mubr.f32.mxu0 0.0
    %665 = vmatmul.mubr.f32.gmra.mrb[0].mxu0 %v599
    %v666 = vpop.f32.mrb[0].mxu0
    %v667 = vadd.f32 0.0, %v666
    %v668 = vpop.f32.mrb[0].mxu0
    %669 = vdwg.mxu0
    %670 = vmatprep.subr.mxu0 0.0
    %671 = vmatpush1.msra.mxu0 %v264
    %672 = vmatprep.subr.mxu0 0.0
    %673 = vmatpush1.msra.mxu0 %v265
    %674 = vmatprep.subr.mxu0 0.0
    %675 = vmatpush1.msra.mxu0 %v266
    %676 = vmatprep.subr.mxu0 0.0
    %677 = vmatpush1.msra.mxu0 %v267
    %678 = vmatprep.subr.mxu0 0.0
    %679 = vmatpush1.msra.mxu0 %v268
    %680 = vmatprep.subr.mxu0 0.0
    %681 = vmatpush1.msra.mxu0 %v269
    %682 = vmatprep.subr.mxu0 0.0
    %683 = vmatpush1.msra.mxu0 %v270
    %684 = vmatprep.subr.mxu0 0.0
    %685 = vmatpush1.msra.mxu0 %v271
    %686 = vmatprep.subr.mxu0 0.0
    %687 = vmatpush1.msra.mxu0 %v272
    %688 = vmatprep.subr.mxu0 0.0
    %689 = vmatpush1.msra.mxu0 %v273
    %690 = vmatprep.subr.mxu0 0.0
    %691 = vmatpush1.msra.mxu0 %v274
    %692 = vmatprep.subr.mxu0 0.0
    %693 = vmatpush1.msra.mxu0 %v275
    %694 = vmatprep.subr.mxu0 0.0
    %695 = vmatpush1.msra.mxu0 %v276
    %696 = vmatprep.subr.mxu0 0.0
    %697 = vmatpush1.msra.mxu0 %v277
    %698 = vmatprep.subr.mxu0 0.0
    %699 = vmatpush1.msra.mxu0 %v278
    %700 = vmatprep.subr.mxu0 0.0
    %701 = vmatpush1.msra.mxu0 %v279
    %702 = vmatprep.subr.mxu0 0.0
    %703 = vmatpush1.msra.mxu0 0.0
    %704 = vmatprep.subr.mxu0 0.0
    %705 = vmatpush1.msra.mxu0 0.0
    %706 = vmatprep.subr.mxu0 0.0
    %707 = vmatpush1.msra.mxu0 0.0
    %708 = vmatprep.subr.mxu0 0.0
    %709 = vmatpush1.msra.mxu0 0.0
    %710 = vmatprep.subr.mxu0 0.0
    %711 = vmatpush1.msra.mxu0 0.0
    %712 = vmatprep.subr.mxu0 0.0
    %713 = vmatpush1.msra.mxu0 0.0
    %714 = vmatprep.subr.mxu0 0.0
    %715 = vmatpush1.msra.mxu0 0.0
    %716 = vmatprep.subr.mxu0 0.0
    %717 = vmatpush1.msra.mxu0 0.0
    %718 = vmatprep.subr.mxu0 0.0
    %719 = vmatpush1.msra.mxu0 0.0
    %720 = vmatprep.subr.mxu0 0.0
    %721 = vmatpush1.msra.mxu0 0.0
    %722 = vmatprep.subr.mxu0 0.0
    %723 = vmatpush1.msra.mxu0 0.0
    %724 = vmatprep.subr.mxu0 0.0
    %725 = vmatpush1.msra.mxu0 0.0
    %726 = vmatprep.subr.mxu0 0.0
    %727 = vmatpush1.msra.mxu0 0.0
    %728 = vmatprep.subr.mxu0 0.0
    %729 = vmatpush1.msra.mxu0 0.0
    %730 = vmatprep.subr.mxu0 0.0
    %731 = vmatpush1.msra.mxu0 0.0
    %732 = vmatprep.subr.mxu0 0.0
    %733 = vmatpush1.msra.mxu0 0.0
    %734 = vmatprep.mubr.f32.mxu0 0.0
    %735 = vmatmul.mubr.f32.gmra.mrb[0].mxu0 %v597
    %v736 = vpop.f32.mrb[0].mxu0
    %v737 = vadd.f32 %v667, %v736
    %v738 = vpop.f32.mrb[0].mxu0
    %739 = vdwg.mxu0
    %v740 = vadd.f32 %v737, %v301
    %v741 = vtanh.pop %v740
    %742 = vst [vmem:[#allocation2 + $0x8] sm:$0xff] %v741
    %s743 = scalar_lea.vmem [#allocation4], 8
    %744 = vst [vmem:[%s743] sm:$0xff] %v741
    %s745 = scalar_lea.vmem [#allocation3], 16
    %v746 = vld [vmem:[%s745] sm:$0xff]
    %v747 = vld [vmem:[#allocation2] sm:$0xff]
    %748 = vmatprep.subr.mxu0 0.0
    %749 = vmatpush1.msra.mxu0 %v248
    %750 = vmatprep.subr.mxu0 0.0
    %751 = vmatpush1.msra.mxu0 %v249
    %752 = vmatprep.subr.mxu0 0.0
    %753 = vmatpush1.msra.mxu0 %v250
    %754 = vmatprep.subr.mxu0 0.0
    %755 = vmatpush1.msra.mxu0 %v251
    %756 = vmatprep.subr.mxu0 0.0
    %757 = vmatpush1.msra.mxu0 %v252
    %758 = vmatprep.subr.mxu0 0.0
    %759 = vmatpush1.msra.mxu0 %v253
    %760 = vmatprep.subr.mxu0 0.0
    %761 = vmatpush1.msra.mxu0 %v254
    %762 = vmatprep.subr.mxu0 0.0
    %763 = vmatpush1.msra.mxu0 %v255
    %764 = vmatprep.subr.mxu0 0.0
    %765 = vmatpush1.msra.mxu0 %v256
    %766 = vmatprep.subr.mxu0 0.0
    %767 = vmatpush1.msra.mxu0 %v257
    %768 = vmatprep.subr.mxu0 0.0
    %769 = vmatpush1.msra.mxu0 %v258
    %770 = vmatprep.subr.mxu0 0.0
    %771 = vmatpush1.msra.mxu0 %v259
    %772 = vmatprep.subr.mxu0 0.0
    %773 = vmatpush1.msra.mxu0 %v260
    %774 = vmatprep.subr.mxu0 0.0
    %775 = vmatpush1.msra.mxu0 %v261
    %776 = vmatprep.subr.mxu0 0.0
    %777 = vmatpush1.msra.mxu0 %v262
    %778 = vmatprep.subr.mxu0 0.0
    %779 = vmatpush1.msra.mxu0 %v263
    %780 = vmatprep.subr.mxu0 0.0
    %781 = vmatpush1.msra.mxu0 0.0
    %782 = vmatprep.subr.mxu0 0.0
    %783 = vmatpush1.msra.mxu0 0.0
    %784 = vmatprep.subr.mxu0 0.0
    %785 = vmatpush1.msra.mxu0 0.0
    %786 = vmatprep.subr.mxu0 0.0
    %787 = vmatpush1.msra.mxu0 0.0
    %788 = vmatprep.subr.mxu0 0.0
    %789 = vmatpush1.msra.mxu0 0.0
    %790 = vmatprep.subr.mxu0 0.0
    %791 = vmatpush1.msra.mxu0 0.0
    %792 = vmatprep.subr.mxu0 0.0
    %793 = vmatpush1.msra.mxu0 0.0
    %794 = vmatprep.subr.mxu0 0.0
    %795 = vmatpush1.msra.mxu0 0.0
    %796 = vmatprep.subr.mxu0 0.0
    %797 = vmatpush1.msra.mxu0 0.0
    %798 = vmatprep.subr.mxu0 0.0
    %799 = vmatpush1.msra.mxu0 0.0
    %800 = vmatprep.subr.mxu0 0.0
    %801 = vmatpush1.msra.mxu0 0.0
    %802 = vmatprep.subr.mxu0 0.0
    %803 = vmatpush1.msra.mxu0 0.0
    %804 = vmatprep.subr.mxu0 0.0
    %805 = vmatpush1.msra.mxu0 0.0
    %806 = vmatprep.subr.mxu0 0.0
    %807 = vmatpush1.msra.mxu0 0.0
    %808 = vmatprep.subr.mxu0 0.0
    %809 = vmatpush1.msra.mxu0 0.0
    %810 = vmatprep.subr.mxu0 0.0
    %811 = vmatpush1.msra.mxu0 0.0
    %812 = vmatprep.mubr.f32.mxu0 0.0
    %813 = vmatmul.mubr.f32.gmra.mrb[0].mxu0 %v747
    %v814 = vpop.f32.mrb[0].mxu0
    %v815 = vadd.f32 0.0, %v814
    %v816 = vpop.f32.mrb[0].mxu0
    %817 = vdwg.mxu0
    %v818 = vadd.f32 %v746, %v815
    %v819 = vtanh.pop %v818
    %820 = vst [vmem:[#allocation2] sm:$0xff] %v819
    %v821 = vld [vmem:[#allocation2 + $0x8] sm:$0xff]
    %822 = vmatprep.subr.mxu0 0.0
    %823 = vmatpush1.msra.mxu0 %v280
    %824 = vmatprep.subr.mxu0 0.0
    %825 = vmatpush1.msra.mxu0 %v281
    %826 = vmatprep.subr.mxu0 0.0
    %827 = vmatpush1.msra.mxu0 %v282
    %828 = vmatprep.subr.mxu0 0.0
    %829 = vmatpush1.msra.mxu0 %v283
    %830 = vmatprep.subr.mxu0 0.0
    %831 = vmatpush1.msra.mxu0 %v284
    %832 = vmatprep.subr.mxu0 0.0
    %833 = vmatpush1.msra.mxu0 %v285
    %834 = vmatprep.subr.mxu0 0.0
    %835 = vmatpush1.msra.mxu0 %v286
    %836 = vmatprep.subr.mxu0 0.0
    %837 = vmatpush1.msra.mxu0 %v287
    %838 = vmatprep.subr.mxu0 0.0
    %839 = vmatpush1.msra.mxu0 %v288
    %840 = vmatprep.subr.mxu0 0.0
    %841 = vmatpush1.msra.mxu0 %v289
    %842 = vmatprep.subr.mxu0 0.0
    %843 = vmatpush1.msra.mxu0 %v290
    %844 = vmatprep.subr.mxu0 0.0
    %845 = vmatpush1.msra.mxu0 %v291
    %846 = vmatprep.subr.mxu0 0.0
    %847 = vmatpush1.msra.mxu0 %v292
    %848 = vmatprep.subr.mxu0 0.0
    %849 = vmatpush1.msra.mxu0 %v293
    %850 = vmatprep.subr.mxu0 0.0
    %851 = vmatpush1.msra.mxu0 %v294
    %852 = vmatprep.subr.mxu0 0.0
    %853 = vmatpush1.msra.mxu0 %v295
    %854 = vmatprep.subr.mxu0 0.0
    %855 = vmatpush1.msra.mxu0 0.0
    %856 = vmatprep.subr.mxu0 0.0
    %857 = vmatpush1.msra.mxu0 0.0
    %858 = vmatprep.subr.mxu0 0.0
    %859 = vmatpush1.msra.mxu0 0.0
    %860 = vmatprep.subr.mxu0 0.0
    %861 = vmatpush1.msra.mxu0 0.0
    %862 = vmatprep.subr.mxu0 0.0
    %863 = vmatpush1.msra.mxu0 0.0
    %864 = vmatprep.subr.mxu0 0.0
    %865 = vmatpush1.msra.mxu0 0.0
    %866 = vmatprep.subr.mxu0 0.0
    %867 = vmatpush1.msra.mxu0 0.0
    %868 = vmatprep.subr.mxu0 0.0
    %869 = vmatpush1.msra.mxu0 0.0
    %870 = vmatprep.subr.mxu0 0.0
    %871 = vmatpush1.msra.mxu0 0.0
    %872 = vmatprep.subr.mxu0 0.0
    %873 = vmatpush1.msra.mxu0 0.0
    %874 = vmatprep.subr.mxu0 0.0
    %875 = vmatpush1.msra.mxu0 0.0
    %876 = vmatprep.subr.mxu0 0.0
    %877 = vmatpush1.msra.mxu0 0.0
    %878 = vmatprep.subr.mxu0 0.0
    %879 = vmatpush1.msra.mxu0 0.0
    %880 = vmatprep.subr.mxu0 0.0
    %881 = vmatpush1.msra.mxu0 0.0
    %882 = vmatprep.subr.mxu0 0.0
    %883 = vmatpush1.msra.mxu0 0.0
    %884 = vmatprep.subr.mxu0 0.0
    %885 = vmatpush1.msra.mxu0 0.0
    %886 = vmatprep.mubr.f32.mxu0 0.0
    %887 = vmatmul.mubr.f32.gmra.mrb[0].mxu0 %v821
    %v888 = vpop.f32.mrb[0].mxu0
    %v889 = vadd.f32 0.0, %v888
    %v890 = vpop.f32.mrb[0].mxu0
    %891 = vdwg.mxu0
    %892 = vmatprep.subr.mxu0 0.0
    %893 = vmatpush1.msra.mxu0 %v264
    %894 = vmatprep.subr.mxu0 0.0
    %895 = vmatpush1.msra.mxu0 %v265
    %896 = vmatprep.subr.mxu0 0.0
    %897 = vmatpush1.msra.mxu0 %v266
    %898 = vmatprep.subr.mxu0 0.0
    %899 = vmatpush1.msra.mxu0 %v267
    %900 = vmatprep.subr.mxu0 0.0
    %901 = vmatpush1.msra.mxu0 %v268
    %902 = vmatprep.subr.mxu0 0.0
    %903 = vmatpush1.msra.mxu0 %v269
    %904 = vmatprep.subr.mxu0 0.0
    %905 = vmatpush1.msra.mxu0 %v270
    %906 = vmatprep.subr.mxu0 0.0
    %907 = vmatpush1.msra.mxu0 %v271
    %908 = vmatprep.subr.mxu0 0.0
    %909 = vmatpush1.msra.mxu0 %v272
    %910 = vmatprep.subr.mxu0 0.0
    %911 = vmatpush1.msra.mxu0 %v273
    %912 = vmatprep.subr.mxu0 0.0
    %913 = vmatpush1.msra.mxu0 %v274
    %914 = vmatprep.subr.mxu0 0.0
    %915 = vmatpush1.msra.mxu0 %v275
    %916 = vmatprep.subr.mxu0 0.0
    %917 = vmatpush1.msra.mxu0 %v276
    %918 = vmatprep.subr.mxu0 0.0
    %919 = vmatpush1.msra.mxu0 %v277
    %920 = vmatprep.subr.mxu0 0.0
    %921 = vmatpush1.msra.mxu0 %v278
    %922 = vmatprep.subr.mxu0 0.0
    %923 = vmatpush1.msra.mxu0 %v279
    %924 = vmatprep.subr.mxu0 0.0
    %925 = vmatpush1.msra.mxu0 0.0
    %926 = vmatprep.subr.mxu0 0.0
    %927 = vmatpush1.msra.mxu0 0.0
    %928 = vmatprep.subr.mxu0 0.0
    %929 = vmatpush1.msra.mxu0 0.0
    %930 = vmatprep.subr.mxu0 0.0
    %931 = vmatpush1.msra.mxu0 0.0
    %932 = vmatprep.subr.mxu0 0.0
    %933 = vmatpush1.msra.mxu0 0.0
    %934 = vmatprep.subr.mxu0 0.0
    %935 = vmatpush1.msra.mxu0 0.0
    %936 = vmatprep.subr.mxu0 0.0
    %937 = vmatpush1.msra.mxu0 0.0
    %938 = vmatprep.subr.mxu0 0.0
    %939 = vmatpush1.msra.mxu0 0.0
    %940 = vmatprep.subr.mxu0 0.0
    %941 = vmatpush1.msra.mxu0 0.0
    %942 = vmatprep.subr.mxu0 0.0
    %943 = vmatpush1.msra.mxu0 0.0
    %944 = vmatprep.subr.mxu0 0.0
    %945 = vmatpush1.msra.mxu0 0.0
    %946 = vmatprep.subr.mxu0 0.0
    %947 = vmatpush1.msra.mxu0 0.0
    %948 = vmatprep.subr.mxu0 0.0
    %949 = vmatpush1.msra.mxu0 0.0
    %950 = vmatprep.subr.mxu0 0.0
    %951 = vmatpush1.msra.mxu0 0.0
    %952 = vmatprep.subr.mxu0 0.0
    %953 = vmatpush1.msra.mxu0 0.0
    %954 = vmatprep.subr.mxu0 0.0
    %955 = vmatpush1.msra.mxu0 0.0
    %956 = vmatprep.mubr.f32.mxu0 0.0
    %957 = vmatmul.mubr.f32.gmra.mrb[0].mxu0 %v819
    %v958 = vpop.f32.mrb[0].mxu0
    %v959 = vadd.f32 %v889, %v958
    %v960 = vpop.f32.mrb[0].mxu0
    %961 = vdwg.mxu0
    %v962 = vadd.f32 %v959, %v301
    %v963 = vtanh.pop %v962
    %964 = vst [vmem:[#allocation2 + $0x8] sm:$0xff] %v963
    %s965 = scalar_lea.vmem [#allocation4], 16
    %966 = vst [vmem:[%s965] sm:$0xff] %v963
    %s967 = scalar_lea.vmem [#allocation3], 24
    %v968 = vld [vmem:[%s967] sm:$0xff]
    %v969 = vld [vmem:[#allocation2] sm:$0xff]
    %970 = vmatprep.subr.mxu0 0.0
    %971 = vmatpush1.msra.mxu0 %v248
    %972 = vmatprep.subr.mxu0 0.0
    %973 = vmatpush1.msra.mxu0 %v249
    %974 = vmatprep.subr.mxu0 0.0
    %975 = vmatpush1.msra.mxu0 %v250
    %976 = vmatprep.subr.mxu0 0.0
    %977 = vmatpush1.msra.mxu0 %v251
    %978 = vmatprep.subr.mxu0 0.0
    %979 = vmatpush1.msra.mxu0 %v252
    %980 = vmatprep.subr.mxu0 0.0
    %981 = vmatpush1.msra.mxu0 %v253
    %982 = vmatprep.subr.mxu0 0.0
    %983 = vmatpush1.msra.mxu0 %v254
    %984 = vmatprep.subr.mxu0 0.0
    %985 = vmatpush1.msra.mxu0 %v255
    %986 = vmatprep.subr.mxu0 0.0
    %987 = vmatpush1.msra.mxu0 %v256
    %988 = vmatprep.subr.mxu0 0.0
    %989 = vmatpush1.msra.mxu0 %v257
    %990 = vmatprep.subr.mxu0 0.0
    %991 = vmatpush1.msra.mxu0 %v258
    %992 = vmatprep.subr.mxu0 0.0
    %993 = vmatpush1.msra.mxu0 %v259
    %994 = vmatprep.subr.mxu0 0.0
    %995 = vmatpush1.msra.mxu0 %v260
    %996 = vmatprep.subr.mxu0 0.0
    %997 = vmatpush1.msra.mxu0 %v261
    %998 = vmatprep.subr.mxu0 0.0
    %999 = vmatpush1.msra.mxu0 %v262
    %1000 = vmatprep.subr.mxu0 0.0
    %1001 = vmatpush1.msra.mxu0 %v263
    %1002 = vmatprep.subr.mxu0 0.0
    %1003 = vmatpush1.msra.mxu0 0.0
    %1004 = vmatprep.subr.mxu0 0.0
    %1005 = vmatpush1.msra.mxu0 0.0
    %1006 = vmatprep.subr.mxu0 0.0
    %1007 = vmatpush1.msra.mxu0 0.0
    %1008 = vmatprep.subr.mxu0 0.0
    %1009 = vmatpush1.msra.mxu0 0.0
    %1010 = vmatprep.subr.mxu0 0.0
    %1011 = vmatpush1.msra.mxu0 0.0
    %1012 = vmatprep.subr.mxu0 0.0
    %1013 = vmatpush1.msra.mxu0 0.0
    %1014 = vmatprep.subr.mxu0 0.0
    %1015 = vmatpush1.msra.mxu0 0.0
    %1016 = vmatprep.subr.mxu0 0.0
    %1017 = vmatpush1.msra.mxu0 0.0
    %1018 = vmatprep.subr.mxu0 0.0
    %1019 = vmatpush1.msra.mxu0 0.0
    %1020 = vmatprep.subr.mxu0 0.0
    %1021 = vmatpush1.msra.mxu0 0.0
    %1022 = vmatprep.subr.mxu0 0.0
    %1023 = vmatpush1.msra.mxu0 0.0
    %1024 = vmatprep.subr.mxu0 0.0
    %1025 = vmatpush1.msra.mxu0 0.0
    %1026 = vmatprep.subr.mxu0 0.0
    %1027 = vmatpush1.msra.mxu0 0.0
    %1028 = vmatprep.subr.mxu0 0.0
    %1029 = vmatpush1.msra.mxu0 0.0
    %1030 = vmatprep.subr.mxu0 0.0
    %1031 = vmatpush1.msra.mxu0 0.0
    %1032 = vmatprep.subr.mxu0 0.0
    %1033 = vmatpush1.msra.mxu0 0.0
    %1034 = vmatprep.mubr.f32.mxu0 0.0
    %1035 = vmatmul.mubr.f32.gmra.mrb[0].mxu0 %v969
    %v1036 = vpop.f32.mrb[0].mxu0
    %v1037 = vadd.f32 0.0, %v1036
    %v1038 = vpop.f32.mrb[0].mxu0
    %1039 = vdwg.mxu0
    %v1040 = vadd.f32 %v968, %v1037
    %v1041 = vtanh.pop %v1040
    %1042 = vst [vmem:[#allocation2] sm:$0xff] %v1041
    %v1043 = vld [vmem:[#allocation2 + $0x8] sm:$0xff]
    %1044 = vmatprep.subr.mxu0 0.0
    %1045 = vmatpush1.msra.mxu0 %v280
    %1046 = vmatprep.subr.mxu0 0.0
    %1047 = vmatpush1.msra.mxu0 %v281
    %1048 = vmatprep.subr.mxu0 0.0
    %1049 = vmatpush1.msra.mxu0 %v282
    %1050 = vmatprep.subr.mxu0 0.0
    %1051 = vmatpush1.msra.mxu0 %v283
    %1052 = vmatprep.subr.mxu0 0.0
    %1053 = vmatpush1.msra.mxu0 %v284
    %1054 = vmatprep.subr.mxu0 0.0
    %1055 = vmatpush1.msra.mxu0 %v285
    %1056 = vmatprep.subr.mxu0 0.0
    %1057 = vmatpush1.msra.mxu0 %v286
    %1058 = vmatprep.subr.mxu0 0.0
    %1059 = vmatpush1.msra.mxu0 %v287
    %1060 = vmatprep.subr.mxu0 0.0
    %1061 = vmatpush1.msra.mxu0 %v288
    %1062 = vmatprep.subr.mxu0 0.0
    %1063 = vmatpush1.msra.mxu0 %v289
    %1064 = vmatprep.subr.mxu0 0.0
    %1065 = vmatpush1.msra.mxu0 %v290
    %1066 = vmatprep.subr.mxu0 0.0
    %1067 = vmatpush1.msra.mxu0 %v291
    %1068 = vmatprep.subr.mxu0 0.0
    %1069 = vmatpush1.msra.mxu0 %v292
    %1070 = vmatprep.subr.mxu0 0.0
    %1071 = vmatpush1.msra.mxu0 %v293
    %1072 = vmatprep.subr.mxu0 0.0
    %1073 = vmatpush1.msra.mxu0 %v294
    %1074 = vmatprep.subr.mxu0 0.0
    %1075 = vmatpush1.msra.mxu0 %v295
    %1076 = vmatprep.subr.mxu0 0.0
    %1077 = vmatpush1.msra.mxu0 0.0
    %1078 = vmatprep.subr.mxu0 0.0
    %1079 = vmatpush1.msra.mxu0 0.0
    %1080 = vmatprep.subr.mxu0 0.0
    %1081 = vmatpush1.msra.mxu0 0.0
    %1082 = vmatprep.subr.mxu0 0.0
    %1083 = vmatpush1.msra.mxu0 0.0
    %1084 = vmatprep.subr.mxu0 0.0
    %1085 = vmatpush1.msra.mxu0 0.0
    %1086 = vmatprep.subr.mxu0 0.0
    %1087 = vmatpush1.msra.mxu0 0.0
    %1088 = vmatprep.subr.mxu0 0.0
    %1089 = vmatpush1.msra.mxu0 0.0
    %1090 = vmatprep.subr.mxu0 0.0
    %1091 = vmatpush1.msra.mxu0 0.0
    %1092 = vmatprep.subr.mxu0 0.0
    %1093 = vmatpush1.msra.mxu0 0.0
    %1094 = vmatprep.subr.mxu0 0.0
    %1095 = vmatpush1.msra.mxu0 0.0
    %1096 = vmatprep.subr.mxu0 0.0
    %1097 = vmatpush1.msra.mxu0 0.0
    %1098 = vmatprep.subr.mxu0 0.0
    %1099 = vmatpush1.msra.mxu0 0.0
    %1100 = vmatprep.subr.mxu0 0.0
    %1101 = vmatpush1.msra.mxu0 0.0
    %1102 = vmatprep.subr.mxu0 0.0
    %1103 = vmatpush1.msra.mxu0 0.0
    %1104 = vmatprep.subr.mxu0 0.0
    %1105 = vmatpush1.msra.mxu0 0.0
    %1106 = vmatprep.subr.mxu0 0.0
    %1107 = vmatpush1.msra.mxu0 0.0
    %1108 = vmatprep.mubr.f32.mxu0 0.0
    %1109 = vmatmul.mubr.f32.gmra.mrb[0].mxu0 %v1043
    %v1110 = vpop.f32.mrb[0].mxu0
    %v1111 = vadd.f32 0.0, %v1110
    %v1112 = vpop.f32.mrb[0].mxu0
    %1113 = vdwg.mxu0
    %1114 = vmatprep.subr.mxu0 0.0
    %1115 = vmatpush1.msra.mxu0 %v264
    %1116 = vmatprep.subr.mxu0 0.0
    %1117 = vmatpush1.msra.mxu0 %v265
    %1118 = vmatprep.subr.mxu0 0.0
    %1119 = vmatpush1.msra.mxu0 %v266
    %1120 = vmatprep.subr.mxu0 0.0
    %1121 = vmatpush1.msra.mxu0 %v267
    %1122 = vmatprep.subr.mxu0 0.0
    %1123 = vmatpush1.msra.mxu0 %v268
    %1124 = vmatprep.subr.mxu0 0.0
    %1125 = vmatpush1.msra.mxu0 %v269
    %1126 = vmatprep.subr.mxu0 0.0
    %1127 = vmatpush1.msra.mxu0 %v270
    %1128 = vmatprep.subr.mxu0 0.0
    %1129 = vmatpush1.msra.mxu0 %v271
    %1130 = vmatprep.subr.mxu0 0.0
    %1131 = vmatpush1.msra.mxu0 %v272
    %1132 = vmatprep.subr.mxu0 0.0
    %1133 = vmatpush1.msra.mxu0 %v273
    %1134 = vmatprep.subr.mxu0 0.0
    %1135 = vmatpush1.msra.mxu0 %v274
    %1136 = vmatprep.subr.mxu0 0.0
    %1137 = vmatpush1.msra.mxu0 %v275
    %1138 = vmatprep.subr.mxu0 0.0
    %1139 = vmatpush1.msra.mxu0 %v276
    %1140 = vmatprep.subr.mxu0 0.0
    %1141 = vmatpush1.msra.mxu0 %v277
    %1142 = vmatprep.subr.mxu0 0.0
    %1143 = vmatpush1.msra.mxu0 %v278
    %1144 = vmatprep.subr.mxu0 0.0
    %1145 = vmatpush1.msra.mxu0 %v279
    %1146 = vmatprep.subr.mxu0 0.0
    %1147 = vmatpush1.msra.mxu0 0.0
    %1148 = vmatprep.subr.mxu0 0.0
    %1149 = vmatpush1.msra.mxu0 0.0
    %1150 = vmatprep.subr.mxu0 0.0
    %1151 = vmatpush1.msra.mxu0 0.0
    %1152 = vmatprep.subr.mxu0 0.0
    %1153 = vmatpush1.msra.mxu0 0.0
    %1154 = vmatprep.subr.mxu0 0.0
    %1155 = vmatpush1.msra.mxu0 0.0
    %1156 = vmatprep.subr.mxu0 0.0
    %1157 = vmatpush1.msra.mxu0 0.0
    %1158 = vmatprep.subr.mxu0 0.0
    %1159 = vmatpush1.msra.mxu0 0.0
    %1160 = vmatprep.subr.mxu0 0.0
    %1161 = vmatpush1.msra.mxu0 0.0
    %1162 = vmatprep.subr.mxu0 0.0
    %1163 = vmatpush1.msra.mxu0 0.0
    %1164 = vmatprep.subr.mxu0 0.0
    %1165 = vmatpush1.msra.mxu0 0.0
    %1166 = vmatprep.subr.mxu0 0.0
    %1167 = vmatpush1.msra.mxu0 0.0
    %1168 = vmatprep.subr.mxu0 0.0
    %1169 = vmatpush1.msra.mxu0 0.0
    %1170 = vmatprep.subr.mxu0 0.0
    %1171 = vmatpush1.msra.mxu0 0.0
    %1172 = vmatprep.subr.mxu0 0.0
    %1173 = vmatpush1.msra.mxu0 0.0
    %1174 = vmatprep.subr.mxu0 0.0
    %1175 = vmatpush1.msra.mxu0 0.0
    %1176 = vmatprep.subr.mxu0 0.0
    %1177 = vmatpush1.msra.mxu0 0.0
    %1178 = vmatprep.mubr.f32.mxu0 0.0
    %1179 = vmatmul.mubr.f32.gmra.mrb[0].mxu0 %v1041
    %v1180 = vpop.f32.mrb[0].mxu0
    %v1181 = vadd.f32 %v1111, %v1180
    %v1182 = vpop.f32.mrb[0].mxu0
    %1183 = vdwg.mxu0
    %v1184 = vadd.f32 %v1181, %v301
    %v1185 = vtanh.pop %v1184
    %1186 = vst [vmem:[#allocation2 + $0x8] sm:$0xff] %v1185
    %s1187 = scalar_lea.vmem [#allocation4], 24
    %1188 = vst [vmem:[%s1187] sm:$0xff] %v1185
    %s1189 = scalar_lea.vmem [#allocation3], 32
    %v1190 = vld [vmem:[%s1189] sm:$0xff]
    %v1191 = vld [vmem:[#allocation2] sm:$0xff]
    %1192 = vmatprep.subr.mxu0 0.0
    %1193 = vmatpush1.msra.mxu0 %v248
    %1194 = vmatprep.subr.mxu0 0.0
    %1195 = vmatpush1.msra.mxu0 %v249
    %1196 = vmatprep.subr.mxu0 0.0
    %1197 = vmatpush1.msra.mxu0 %v250
    %1198 = vmatprep.subr.mxu0 0.0
    %1199 = vmatpush1.msra.mxu0 %v251
    %1200 = vmatprep.subr.mxu0 0.0
    %1201 = vmatpush1.msra.mxu0 %v252
    %1202 = vmatprep.subr.mxu0 0.0
    %1203 = vmatpush1.msra.mxu0 %v253
    %1204 = vmatprep.subr.mxu0 0.0
    %1205 = vmatpush1.msra.mxu0 %v254
    %1206 = vmatprep.subr.mxu0 0.0
    %1207 = vmatpush1.msra.mxu0 %v255
    %1208 = vmatprep.subr.mxu0 0.0
    %1209 = vmatpush1.msra.mxu0 %v256
    %1210 = vmatprep.subr.mxu0 0.0
    %1211 = vmatpush1.msra.mxu0 %v257
    %1212 = vmatprep.subr.mxu0 0.0
    %1213 = vmatpush1.msra.mxu0 %v258
    %1214 = vmatprep.subr.mxu0 0.0
    %1215 = vmatpush1.msra.mxu0 %v259
    %1216 = vmatprep.subr.mxu0 0.0
    %1217 = vmatpush1.msra.mxu0 %v260
    %1218 = vmatprep.subr.mxu0 0.0
    %1219 = vmatpush1.msra.mxu0 %v261
    %1220 = vmatprep.subr.mxu0 0.0
    %1221 = vmatpush1.msra.mxu0 %v262
    %1222 = vmatprep.subr.mxu0 0.0
    %1223 = vmatpush1.msra.mxu0 %v263
    %1224 = vmatprep.subr.mxu0 0.0
    %1225 = vmatpush1.msra.mxu0 0.0
    %1226 = vmatprep.subr.mxu0 0.0
    %1227 = vmatpush1.msra.mxu0 0.0
    %1228 = vmatprep.subr.mxu0 0.0
    %1229 = vmatpush1.msra.mxu0 0.0
    %1230 = vmatprep.subr.mxu0 0.0
    %1231 = vmatpush1.msra.mxu0 0.0
    %1232 = vmatprep.subr.mxu0 0.0
    %1233 = vmatpush1.msra.mxu0 0.0
    %1234 = vmatprep.subr.mxu0 0.0
    %1235 = vmatpush1.msra.mxu0 0.0
    %1236 = vmatprep.subr.mxu0 0.0
    %1237 = vmatpush1.msra.mxu0 0.0
    %1238 = vmatprep.subr.mxu0 0.0
    %1239 = vmatpush1.msra.mxu0 0.0
    %1240 = vmatprep.subr.mxu0 0.0
    %1241 = vmatpush1.msra.mxu0 0.0
    %1242 = vmatprep.subr.mxu0 0.0
    %1243 = vmatpush1.msra.mxu0 0.0
    %1244 = vmatprep.subr.mxu0 0.0
    %1245 = vmatpush1.msra.mxu0 0.0
    %1246 = vmatprep.subr.mxu0 0.0
    %1247 = vmatpush1.msra.mxu0 0.0
    %1248 = vmatprep.subr.mxu0 0.0
    %1249 = vmatpush1.msra.mxu0 0.0
    %1250 = vmatprep.subr.mxu0 0.0
    %1251 = vmatpush1.msra.mxu0 0.0
    %1252 = vmatprep.subr.mxu0 0.0
    %1253 = vmatpush1.msra.mxu0 0.0
    %1254 = vmatprep.subr.mxu0 0.0
    %1255 = vmatpush1.msra.mxu0 0.0
    %1256 = vmatprep.mubr.f32.mxu0 0.0
    %1257 = vmatmul.mubr.f32.gmra.mrb[0].mxu0 %v1191
    %v1258 = vpop.f32.mrb[0].mxu0
    %v1259 = vadd.f32 0.0, %v1258
    %v1260 = vpop.f32.mrb[0].mxu0
    %1261 = vdwg.mxu0
    %v1262 = vadd.f32 %v1190, %v1259
    %v1263 = vtanh.pop %v1262
    %1264 = vst [vmem:[#allocation2] sm:$0xff] %v1263
    %v1265 = vld [vmem:[#allocation2 + $0x8] sm:$0xff]
    %1266 = vmatprep.subr.mxu0 0.0
    %1267 = vmatpush1.msra.mxu0 %v280
    %1268 = vmatprep.subr.mxu0 0.0
    %1269 = vmatpush1.msra.mxu0 %v281
    %1270 = vmatprep.subr.mxu0 0.0
    %1271 = vmatpush1.msra.mxu0 %v282
    %1272 = vmatprep.subr.mxu0 0.0
    %1273 = vmatpush1.msra.mxu0 %v283
    %1274 = vmatprep.subr.mxu0 0.0
    %1275 = vmatpush1.msra.mxu0 %v284
    %1276 = vmatprep.subr.mxu0 0.0
    %1277 = vmatpush1.msra.mxu0 %v285
    %1278 = vmatprep.subr.mxu0 0.0
    %1279 = vmatpush1.msra.mxu0 %v286
    %1280 = vmatprep.subr.mxu0 0.0
    %1281 = vmatpush1.msra.mxu0 %v287
    %1282 = vmatprep.subr.mxu0 0.0
    %1283 = vmatpush1.msra.mxu0 %v288
    %1284 = vmatprep.subr.mxu0 0.0
    %1285 = vmatpush1.msra.mxu0 %v289
    %1286 = vmatprep.subr.mxu0 0.0
    %1287 = vmatpush1.msra.mxu0 %v290
    %1288 = vmatprep.subr.mxu0 0.0
    %1289 = vmatpush1.msra.mxu0 %v291
    %1290 = vmatprep.subr.mxu0 0.0
    %1291 = vmatpush1.msra.mxu0 %v292
    %1292 = vmatprep.subr.mxu0 0.0
    %1293 = vmatpush1.msra.mxu0 %v293
    %1294 = vmatprep.subr.mxu0 0.0
    %1295 = vmatpush1.msra.mxu0 %v294
    %1296 = vmatprep.subr.mxu0 0.0
    %1297 = vmatpush1.msra.mxu0 %v295
    %1298 = vmatprep.subr.mxu0 0.0
    %1299 = vmatpush1.msra.mxu0 0.0
    %1300 = vmatprep.subr.mxu0 0.0
    %1301 = vmatpush1.msra.mxu0 0.0
    %1302 = vmatprep.subr.mxu0 0.0
    %1303 = vmatpush1.msra.mxu0 0.0
    %1304 = vmatprep.subr.mxu0 0.0
    %1305 = vmatpush1.msra.mxu0 0.0
    %1306 = vmatprep.subr.mxu0 0.0
    %1307 = vmatpush1.msra.mxu0 0.0
    %1308 = vmatprep.subr.mxu0 0.0
    %1309 = vmatpush1.msra.mxu0 0.0
    %1310 = vmatprep.subr.mxu0 0.0
    %1311 = vmatpush1.msra.mxu0 0.0
    %1312 = vmatprep.subr.mxu0 0.0
    %1313 = vmatpush1.msra.mxu0 0.0
    %1314 = vmatprep.subr.mxu0 0.0
    %1315 = vmatpush1.msra.mxu0 0.0
    %1316 = vmatprep.subr.mxu0 0.0
    %1317 = vmatpush1.msra.mxu0 0.0
    %1318 = vmatprep.subr.mxu0 0.0
    %1319 = vmatpush1.msra.mxu0 0.0
    %1320 = vmatprep.subr.mxu0 0.0
    %1321 = vmatpush1.msra.mxu0 0.0
    %1322 = vmatprep.subr.mxu0 0.0
    %1323 = vmatpush1.msra.mxu0 0.0
    %1324 = vmatprep.subr.mxu0 0.0
    %1325 = vmatpush1.msra.mxu0 0.0
    %1326 = vmatprep.subr.mxu0 0.0
    %1327 = vmatpush1.msra.mxu0 0.0
    %1328 = vmatprep.subr.mxu0 0.0
    %1329 = vmatpush1.msra.mxu0 0.0
    %1330 = vmatprep.mubr.f32.mxu0 0.0
    %1331 = vmatmul.mubr.f32.gmra.mrb[0].mxu0 %v1265
    %v1332 = vpop.f32.mrb[0].mxu0
    %v1333 = vadd.f32 0.0, %v1332
    %v1334 = vpop.f32.mrb[0].mxu0
    %1335 = vdwg.mxu0
    %1336 = vmatprep.subr.mxu0 0.0
    %1337 = vmatpush1.msra.mxu0 %v264
    %1338 = vmatprep.subr.mxu0 0.0
    %1339 = vmatpush1.msra.mxu0 %v265
    %1340 = vmatprep.subr.mxu0 0.0
    %1341 = vmatpush1.msra.mxu0 %v266
    %1342 = vmatprep.subr.mxu0 0.0
    %1343 = vmatpush1.msra.mxu0 %v267
    %1344 = vmatprep.subr.mxu0 0.0
    %1345 = vmatpush1.msra.mxu0 %v268
    %1346 = vmatprep.subr.mxu0 0.0
    %1347 = vmatpush1.msra.mxu0 %v269
    %1348 = vmatprep.subr.mxu0 0.0
    %1349 = vmatpush1.msra.mxu0 %v270
    %1350 = vmatprep.subr.mxu0 0.0
    %1351 = vmatpush1.msra.mxu0 %v271
    %1352 = vmatprep.subr.mxu0 0.0
    %1353 = vmatpush1.msra.mxu0 %v272
    %1354 = vmatprep.subr.mxu0 0.0
    %1355 = vmatpush1.msra.mxu0 %v273
    %1356 = vmatprep.subr.mxu0 0.0
    %1357 = vmatpush1.msra.mxu0 %v274
    %1358 = vmatprep.subr.mxu0 0.0
    %1359 = vmatpush1.msra.mxu0 %v275
    %1360 = vmatprep.subr.mxu0 0.0
    %1361 = vmatpush1.msra.mxu0 %v276
    %1362 = vmatprep.subr.mxu0 0.0
    %1363 = vmatpush1.msra.mxu0 %v277
    %1364 = vmatprep.subr.mxu0 0.0
    %1365 = vmatpush1.msra.mxu0 %v278
    %1366 = vmatprep.subr.mxu0 0.0
    %1367 = vmatpush1.msra.mxu0 %v279
    %1368 = vmatprep.subr.mxu0 0.0
    %1369 = vmatpush1.msra.mxu0 0.0
    %1370 = vmatprep.subr.mxu0 0.0
    %1371 = vmatpush1.msra.mxu0 0.0
    %1372 = vmatprep.subr.mxu0 0.0
    %1373 = vmatpush1.msra.mxu0 0.0
    %1374 = vmatprep.subr.mxu0 0.0
    %1375 = vmatpush1.msra.mxu0 0.0
    %1376 = vmatprep.subr.mxu0 0.0
    %1377 = vmatpush1.msra.mxu0 0.0
    %1378 = vmatprep.subr.mxu0 0.0
    %1379 = vmatpush1.msra.mxu0 0.0
    %1380 = vmatprep.subr.mxu0 0.0
    %1381 = vmatpush1.msra.mxu0 0.0
    %1382 = vmatprep.subr.mxu0 0.0
    %1383 = vmatpush1.msra.mxu0 0.0
    %1384 = vmatprep.subr.mxu0 0.0
    %1385 = vmatpush1.msra.mxu0 0.0
    %1386 = vmatprep.subr.mxu0 0.0
    %1387 = vmatpush1.msra.mxu0 0.0
    %1388 = vmatprep.subr.mxu0 0.0
    %1389 = vmatpush1.msra.mxu0 0.0
    %1390 = vmatprep.subr.mxu0 0.0
    %1391 = vmatpush1.msra.mxu0 0.0
    %1392 = vmatprep.subr.mxu0 0.0
    %1393 = vmatpush1.msra.mxu0 0.0
    %1394 = vmatprep.subr.mxu0 0.0
    %1395 = vmatpush1.msra.mxu0 0.0
    %1396 = vmatprep.subr.mxu0 0.0
    %1397 = vmatpush1.msra.mxu0 0.0
    %1398 = vmatprep.subr.mxu0 0.0
    %1399 = vmatpush1.msra.mxu0 0.0
    %1400 = vmatprep.mubr.f32.mxu0 0.0
    %1401 = vmatmul.mubr.f32.gmra.mrb[0].mxu0 %v1263
    %v1402 = vpop.f32.mrb[0].mxu0
    %v1403 = vadd.f32 %v1333, %v1402
    %v1404 = vpop.f32.mrb[0].mxu0
    %1405 = vdwg.mxu0
    %v1406 = vadd.f32 %v1403, %v301
    %v1407 = vtanh.pop %v1406
    %1408 = vst [vmem:[#allocation2 + $0x8] sm:$0xff] %v1407
    %s1409 = scalar_lea.vmem [#allocation4], 32
    %1410 = vst [vmem:[%s1409] sm:$0xff] %v1407
    %s1411 = scalar_lea.vmem [#allocation3], 40
    %v1412 = vld [vmem:[%s1411] sm:$0xff]
    %v1413 = vld [vmem:[#allocation2] sm:$0xff]
    %1414 = vmatprep.subr.mxu0 0.0
    %1415 = vmatpush1.msra.mxu0 %v248
    %1416 = vmatprep.subr.mxu0 0.0
    %1417 = vmatpush1.msra.mxu0 %v249
    %1418 = vmatprep.subr.mxu0 0.0
    %1419 = vmatpush1.msra.mxu0 %v250
    %1420 = vmatprep.subr.mxu0 0.0
    %1421 = vmatpush1.msra.mxu0 %v251
    %1422 = vmatprep.subr.mxu0 0.0
    %1423 = vmatpush1.msra.mxu0 %v252
    %1424 = vmatprep.subr.mxu0 0.0
    %1425 = vmatpush1.msra.mxu0 %v253
    %1426 = vmatprep.subr.mxu0 0.0
    %1427 = vmatpush1.msra.mxu0 %v254
    %1428 = vmatprep.subr.mxu0 0.0
    %1429 = vmatpush1.msra.mxu0 %v255
    %1430 = vmatprep.subr.mxu0 0.0
    %1431 = vmatpush1.msra.mxu0 %v256
    %1432 = vmatprep.subr.mxu0 0.0
    %1433 = vmatpush1.msra.mxu0 %v257
    %1434 = vmatprep.subr.mxu0 0.0
    %1435 = vmatpush1.msra.mxu0 %v258
    %1436 = vmatprep.subr.mxu0 0.0
    %1437 = vmatpush1.msra.mxu0 %v259
    %1438 = vmatprep.subr.mxu0 0.0
    %1439 = vmatpush1.msra.mxu0 %v260
    %1440 = vmatprep.subr.mxu0 0.0
    %1441 = vmatpush1.msra.mxu0 %v261
    %1442 = vmatprep.subr.mxu0 0.0
    %1443 = vmatpush1.msra.mxu0 %v262
    %1444 = vmatprep.subr.mxu0 0.0
    %1445 = vmatpush1.msra.mxu0 %v263
    %1446 = vmatprep.subr.mxu0 0.0
    %1447 = vmatpush1.msra.mxu0 0.0
    %1448 = vmatprep.subr.mxu0 0.0
    %1449 = vmatpush1.msra.mxu0 0.0
    %1450 = vmatprep.subr.mxu0 0.0
    %1451 = vmatpush1.msra.mxu0 0.0
    %1452 = vmatprep.subr.mxu0 0.0
    %1453 = vmatpush1.msra.mxu0 0.0
    %1454 = vmatprep.subr.mxu0 0.0
    %1455 = vmatpush1.msra.mxu0 0.0
    %1456 = vmatprep.subr.mxu0 0.0
    %1457 = vmatpush1.msra.mxu0 0.0
    %1458 = vmatprep.subr.mxu0 0.0
    %1459 = vmatpush1.msra.mxu0 0.0
    %1460 = vmatprep.subr.mxu0 0.0
    %1461 = vmatpush1.msra.mxu0 0.0
    %1462 = vmatprep.subr.mxu0 0.0
    %1463 = vmatpush1.msra.mxu0 0.0
    %1464 = vmatprep.subr.mxu0 0.0
    %1465 = vmatpush1.msra.mxu0 0.0
    %1466 = vmatprep.subr.mxu0 0.0
    %1467 = vmatpush1.msra.mxu0 0.0
    %1468 = vmatprep.subr.mxu0 0.0
    %1469 = vmatpush1.msra.mxu0 0.0
    %1470 = vmatprep.subr.mxu0 0.0
    %1471 = vmatpush1.msra.mxu0 0.0
    %1472 = vmatprep.subr.mxu0 0.0
    %1473 = vmatpush1.msra.mxu0 0.0
    %1474 = vmatprep.subr.mxu0 0.0
    %1475 = vmatpush1.msra.mxu0 0.0
    %1476 = vmatprep.subr.mxu0 0.0
    %1477 = vmatpush1.msra.mxu0 0.0
    %1478 = vmatprep.mubr.f32.mxu0 0.0
    %1479 = vmatmul.mubr.f32.gmra.mrb[0].mxu0 %v1413
    %v1480 = vpop.f32.mrb[0].mxu0
    %v1481 = vadd.f32 0.0, %v1480
    %v1482 = vpop.f32.mrb[0].mxu0
    %1483 = vdwg.mxu0
    %v1484 = vadd.f32 %v1412, %v1481
    %v1485 = vtanh.pop %v1484
    %1486 = vst [vmem:[#allocation2] sm:$0xff] %v1485
    %v1487 = vld [vmem:[#allocation2 + $0x8] sm:$0xff]
    %1488 = vmatprep.subr.mxu0 0.0
    %1489 = vmatpush1.msra.mxu0 %v280
    %1490 = vmatprep.subr.mxu0 0.0
    %1491 = vmatpush1.msra.mxu0 %v281
    %1492 = vmatprep.subr.mxu0 0.0
    %1493 = vmatpush1.msra.mxu0 %v282
    %1494 = vmatprep.subr.mxu0 0.0
    %1495 = vmatpush1.msra.mxu0 %v283
    %1496 = vmatprep.subr.mxu0 0.0
    %1497 = vmatpush1.msra.mxu0 %v284
    %1498 = vmatprep.subr.mxu0 0.0
    %1499 = vmatpush1.msra.mxu0 %v285
    %1500 = vmatprep.subr.mxu0 0.0
    %1501 = vmatpush1.msra.mxu0 %v286
    %1502 = vmatprep.subr.mxu0 0.0
    %1503 = vmatpush1.msra.mxu0 %v287
    %1504 = vmatprep.subr.mxu0 0.0
    %1505 = vmatpush1.msra.mxu0 %v288
    %1506 = vmatprep.subr.mxu0 0.0
    %1507 = vmatpush1.msra.mxu0 %v289
    %1508 = vmatprep.subr.mxu0 0.0
    %1509 = vmatpush1.msra.mxu0 %v290
    %1510 = vmatprep.subr.mxu0 0.0
    %1511 = vmatpush1.msra.mxu0 %v291
    %1512 = vmatprep.subr.mxu0 0.0
    %1513 = vmatpush1.msra.mxu0 %v292
    %1514 = vmatprep.subr.mxu0 0.0
    %1515 = vmatpush1.msra.mxu0 %v293
    %1516 = vmatprep.subr.mxu0 0.0
    %1517 = vmatpush1.msra.mxu0 %v294
    %1518 = vmatprep.subr.mxu0 0.0
    %1519 = vmatpush1.msra.mxu0 %v295
    %1520 = vmatprep.subr.mxu0 0.0
    %1521 = vmatpush1.msra.mxu0 0.0
    %1522 = vmatprep.subr.mxu0 0.0
    %1523 = vmatpush1.msra.mxu0 0.0
    %1524 = vmatprep.subr.mxu0 0.0
    %1525 = vmatpush1.msra.mxu0 0.0
    %1526 = vmatprep.subr.mxu0 0.0
    %1527 = vmatpush1.msra.mxu0 0.0
    %1528 = vmatprep.subr.mxu0 0.0
    %1529 = vmatpush1.msra.mxu0 0.0
    %1530 = vmatprep.subr.mxu0 0.0
    %1531 = vmatpush1.msra.mxu0 0.0
    %1532 = vmatprep.subr.mxu0 0.0
    %1533 = vmatpush1.msra.mxu0 0.0
    %1534 = vmatprep.subr.mxu0 0.0
    %1535 = vmatpush1.msra.mxu0 0.0
    %1536 = vmatprep.subr.mxu0 0.0
    %1537 = vmatpush1.msra.mxu0 0.0
    %1538 = vmatprep.subr.mxu0 0.0
    %1539 = vmatpush1.msra.mxu0 0.0
    %1540 = vmatprep.subr.mxu0 0.0
    %1541 = vmatpush1.msra.mxu0 0.0
    %1542 = vmatprep.subr.mxu0 0.0
    %1543 = vmatpush1.msra.mxu0 0.0
    %1544 = vmatprep.subr.mxu0 0.0
    %1545 = vmatpush1.msra.mxu0 0.0
    %1546 = vmatprep.subr.mxu0 0.0
    %1547 = vmatpush1.msra.mxu0 0.0
    %1548 = vmatprep.subr.mxu0 0.0
    %1549 = vmatpush1.msra.mxu0 0.0
    %1550 = vmatprep.subr.mxu0 0.0
    %1551 = vmatpush1.msra.mxu0 0.0
    %1552 = vmatprep.mubr.f32.mxu0 0.0
    %1553 = vmatmul.mubr.f32.gmra.mrb[0].mxu0 %v1487
    %v1554 = vpop.f32.mrb[0].mxu0
    %v1555 = vadd.f32 0.0, %v1554
    %v1556 = vpop.f32.mrb[0].mxu0
    %1557 = vdwg.mxu0
    %1558 = vmatprep.subr.mxu0 0.0
    %1559 = vmatpush1.msra.mxu0 %v264
    %1560 = vmatprep.subr.mxu0 0.0
    %1561 = vmatpush1.msra.mxu0 %v265
    %1562 = vmatprep.subr.mxu0 0.0
    %1563 = vmatpush1.msra.mxu0 %v266
    %1564 = vmatprep.subr.mxu0 0.0
    %1565 = vmatpush1.msra.mxu0 %v267
    %1566 = vmatprep.subr.mxu0 0.0
    %1567 = vmatpush1.msra.mxu0 %v268
    %1568 = vmatprep.subr.mxu0 0.0
    %1569 = vmatpush1.msra.mxu0 %v269
    %1570 = vmatprep.subr.mxu0 0.0
    %1571 = vmatpush1.msra.mxu0 %v270
    %1572 = vmatprep.subr.mxu0 0.0
    %1573 = vmatpush1.msra.mxu0 %v271
    %1574 = vmatprep.subr.mxu0 0.0
    %1575 = vmatpush1.msra.mxu0 %v272
    %1576 = vmatprep.subr.mxu0 0.0
    %1577 = vmatpush1.msra.mxu0 %v273
    %1578 = vmatprep.subr.mxu0 0.0
    %1579 = vmatpush1.msra.mxu0 %v274
    %1580 = vmatprep.subr.mxu0 0.0
    %1581 = vmatpush1.msra.mxu0 %v275
    %1582 = vmatprep.subr.mxu0 0.0
    %1583 = vmatpush1.msra.mxu0 %v276
    %1584 = vmatprep.subr.mxu0 0.0
    %1585 = vmatpush1.msra.mxu0 %v277
    %1586 = vmatprep.subr.mxu0 0.0
    %1587 = vmatpush1.msra.mxu0 %v278
    %1588 = vmatprep.subr.mxu0 0.0
    %1589 = vmatpush1.msra.mxu0 %v279
    %1590 = vmatprep.subr.mxu0 0.0
    %1591 = vmatpush1.msra.mxu0 0.0
    %1592 = vmatprep.subr.mxu0 0.0
    %1593 = vmatpush1.msra.mxu0 0.0
    %1594 = vmatprep.subr.mxu0 0.0
    %1595 = vmatpush1.msra.mxu0 0.0
    %1596 = vmatprep.subr.mxu0 0.0
    %1597 = vmatpush1.msra.mxu0 0.0
    %1598 = vmatprep.subr.mxu0 0.0
    %1599 = vmatpush1.msra.mxu0 0.0
    %1600 = vmatprep.subr.mxu0 0.0
    %1601 = vmatpush1.msra.mxu0 0.0
    %1602 = vmatprep.subr.mxu0 0.0
    %1603 = vmatpush1.msra.mxu0 0.0
    %1604 = vmatprep.subr.mxu0 0.0
    %1605 = vmatpush1.msra.mxu0 0.0
    %1606 = vmatprep.subr.mxu0 0.0
    %1607 = vmatpush1.msra.mxu0 0.0
    %1608 = vmatprep.subr.mxu0 0.0
    %1609 = vmatpush1.msra.mxu0 0.0
    %1610 = vmatprep.subr.mxu0 0.0
    %1611 = vmatpush1.msra.mxu0 0.0
    %1612 = vmatprep.subr.mxu0 0.0
    %1613 = vmatpush1.msra.mxu0 0.0
    %1614 = vmatprep.subr.mxu0 0.0
    %1615 = vmatpush1.msra.mxu0 0.0
    %1616 = vmatprep.subr.mxu0 0.0
    %1617 = vmatpush1.msra.mxu0 0.0
    %1618 = vmatprep.subr.mxu0 0.0
    %1619 = vmatpush1.msra.mxu0 0.0
    %1620 = vmatprep.subr.mxu0 0.0
    %1621 = vmatpush1.msra.mxu0 0.0
    %1622 = vmatprep.mubr.f32.mxu0 0.0
    %1623 = vmatmul.mubr.f32.gmra.mrb[0].mxu0 %v1485
    %v1624 = vpop.f32.mrb[0].mxu0
    %v1625 = vadd.f32 %v1555, %v1624
    %v1626 = vpop.f32.mrb[0].mxu0
    %1627 = vdwg.mxu0
    %v1628 = vadd.f32 %v1625, %v301
    %v1629 = vtanh.pop %v1628
    %1630 = vst [vmem:[#allocation2 + $0x8] sm:$0xff] %v1629
    %s1631 = scalar_lea.vmem [#allocation4], 40
    %1632 = vst [vmem:[%s1631] sm:$0xff] %v1629
    %s1633 = scalar_lea.vmem [#allocation3], 48
    %v1634 = vld [vmem:[%s1633] sm:$0xff]
    %v1635 = vld [vmem:[#allocation2] sm:$0xff]
    %1636 = vmatprep.subr.mxu0 0.0
    %1637 = vmatpush1.msra.mxu0 %v248
    %1638 = vmatprep.subr.mxu0 0.0
    %1639 = vmatpush1.msra.mxu0 %v249
    %1640 = vmatprep.subr.mxu0 0.0
    %1641 = vmatpush1.msra.mxu0 %v250
    %1642 = vmatprep.subr.mxu0 0.0
    %1643 = vmatpush1.msra.mxu0 %v251
    %1644 = vmatprep.subr.mxu0 0.0
    %1645 = vmatpush1.msra.mxu0 %v252
    %1646 = vmatprep.subr.mxu0 0.0
    %1647 = vmatpush1.msra.mxu0 %v253
    %1648 = vmatprep.subr.mxu0 0.0
    %1649 = vmatpush1.msra.mxu0 %v254
    %1650 = vmatprep.subr.mxu0 0.0
    %1651 = vmatpush1.msra.mxu0 %v255
    %1652 = vmatprep.subr.mxu0 0.0
    %1653 = vmatpush1.msra.mxu0 %v256
    %1654 = vmatprep.subr.mxu0 0.0
    %1655 = vmatpush1.msra.mxu0 %v257
    %1656 = vmatprep.subr.mxu0 0.0
    %1657 = vmatpush1.msra.mxu0 %v258
    %1658 = vmatprep.subr.mxu0 0.0
    %1659 = vmatpush1.msra.mxu0 %v259
    %1660 = vmatprep.subr.mxu0 0.0
    %1661 = vmatpush1.msra.mxu0 %v260
    %1662 = vmatprep.subr.mxu0 0.0
    %1663 = vmatpush1.msra.mxu0 %v261
    %1664 = vmatprep.subr.mxu0 0.0
    %1665 = vmatpush1.msra.mxu0 %v262
    %1666 = vmatprep.subr.mxu0 0.0
    %1667 = vmatpush1.msra.mxu0 %v263
    %1668 = vmatprep.subr.mxu0 0.0
    %1669 = vmatpush1.msra.mxu0 0.0
    %1670 = vmatprep.subr.mxu0 0.0
    %1671 = vmatpush1.msra.mxu0 0.0
    %1672 = vmatprep.subr.mxu0 0.0
    %1673 = vmatpush1.msra.mxu0 0.0
    %1674 = vmatprep.subr.mxu0 0.0
    %1675 = vmatpush1.msra.mxu0 0.0
    %1676 = vmatprep.subr.mxu0 0.0
    %1677 = vmatpush1.msra.mxu0 0.0
    %1678 = vmatprep.subr.mxu0 0.0
    %1679 = vmatpush1.msra.mxu0 0.0
    %1680 = vmatprep.subr.mxu0 0.0
    %1681 = vmatpush1.msra.mxu0 0.0
    %1682 = vmatprep.subr.mxu0 0.0
    %1683 = vmatpush1.msra.mxu0 0.0
    %1684 = vmatprep.subr.mxu0 0.0
    %1685 = vmatpush1.msra.mxu0 0.0
    %1686 = vmatprep.subr.mxu0 0.0
    %1687 = vmatpush1.msra.mxu0 0.0
    %1688 = vmatprep.subr.mxu0 0.0
    %1689 = vmatpush1.msra.mxu0 0.0
    %1690 = vmatprep.subr.mxu0 0.0
    %1691 = vmatpush1.msra.mxu0 0.0
    %1692 = vmatprep.subr.mxu0 0.0
    %1693 = vmatpush1.msra.mxu0 0.0
    %1694 = vmatprep.subr.mxu0 0.0
    %1695 = vmatpush1.msra.mxu0 0.0
    %1696 = vmatprep.subr.mxu0 0.0
    %1697 = vmatpush1.msra.mxu0 0.0
    %1698 = vmatprep.subr.mxu0 0.0
    %1699 = vmatpush1.msra.mxu0 0.0
    %1700 = vmatprep.mubr.f32.mxu0 0.0
    %1701 = vmatmul.mubr.f32.gmra.mrb[0].mxu0 %v1635
    %v1702 = vpop.f32.mrb[0].mxu0
    %v1703 = vadd.f32 0.0, %v1702
    %v1704 = vpop.f32.mrb[0].mxu0
    %1705 = vdwg.mxu0
    %v1706 = vadd.f32 %v1634, %v1703
    %v1707 = vtanh.pop %v1706
    %1708 = vst [vmem:[#allocation2] sm:$0xff] %v1707
    %v1709 = vld [vmem:[#allocation2 + $0x8] sm:$0xff]
    %1710 = vmatprep.subr.mxu0 0.0
    %1711 = vmatpush1.msra.mxu0 %v280
    %1712 = vmatprep.subr.mxu0 0.0
    %1713 = vmatpush1.msra.mxu0 %v281
    %1714 = vmatprep.subr.mxu0 0.0
    %1715 = vmatpush1.msra.mxu0 %v282
    %1716 = vmatprep.subr.mxu0 0.0
    %1717 = vmatpush1.msra.mxu0 %v283
    %1718 = vmatprep.subr.mxu0 0.0
    %1719 = vmatpush1.msra.mxu0 %v284
    %1720 = vmatprep.subr.mxu0 0.0
    %1721 = vmatpush1.msra.mxu0 %v285
    %1722 = vmatprep.subr.mxu0 0.0
    %1723 = vmatpush1.msra.mxu0 %v286
    %1724 = vmatprep.subr.mxu0 0.0
    %1725 = vmatpush1.msra.mxu0 %v287
    %1726 = vmatprep.subr.mxu0 0.0
    %1727 = vmatpush1.msra.mxu0 %v288
    %1728 = vmatprep.subr.mxu0 0.0
    %1729 = vmatpush1.msra.mxu0 %v289
    %1730 = vmatprep.subr.mxu0 0.0
    %1731 = vmatpush1.msra.mxu0 %v290
    %1732 = vmatprep.subr.mxu0 0.0
    %1733 = vmatpush1.msra.mxu0 %v291
    %1734 = vmatprep.subr.mxu0 0.0
    %1735 = vmatpush1.msra.mxu0 %v292
    %1736 = vmatprep.subr.mxu0 0.0
    %1737 = vmatpush1.msra.mxu0 %v293
    %1738 = vmatprep.subr.mxu0 0.0
    %1739 = vmatpush1.msra.mxu0 %v294
    %1740 = vmatprep.subr.mxu0 0.0
    %1741 = vmatpush1.msra.mxu0 %v295
    %1742 = vmatprep.subr.mxu0 0.0
    %1743 = vmatpush1.msra.mxu0 0.0
    %1744 = vmatprep.subr.mxu0 0.0
    %1745 = vmatpush1.msra.mxu0 0.0
    %1746 = vmatprep.subr.mxu0 0.0
    %1747 = vmatpush1.msra.mxu0 0.0
    %1748 = vmatprep.subr.mxu0 0.0
    %1749 = vmatpush1.msra.mxu0 0.0
    %1750 = vmatprep.subr.mxu0 0.0
    %1751 = vmatpush1.msra.mxu0 0.0
    %1752 = vmatprep.subr.mxu0 0.0
    %1753 = vmatpush1.msra.mxu0 0.0
    %1754 = vmatprep.subr.mxu0 0.0
    %1755 = vmatpush1.msra.mxu0 0.0
    %1756 = vmatprep.subr.mxu0 0.0
    %1757 = vmatpush1.msra.mxu0 0.0
    %1758 = vmatprep.subr.mxu0 0.0
    %1759 = vmatpush1.msra.mxu0 0.0
    %1760 = vmatprep.subr.mxu0 0.0
    %1761 = vmatpush1.msra.mxu0 0.0
    %1762 = vmatprep.subr.mxu0 0.0
    %1763 = vmatpush1.msra.mxu0 0.0
    %1764 = vmatprep.subr.mxu0 0.0
    %1765 = vmatpush1.msra.mxu0 0.0
    %1766 = vmatprep.subr.mxu0 0.0
    %1767 = vmatpush1.msra.mxu0 0.0
    %1768 = vmatprep.subr.mxu0 0.0
    %1769 = vmatpush1.msra.mxu0 0.0
    %1770 = vmatprep.subr.mxu0 0.0
    %1771 = vmatpush1.msra.mxu0 0.0
    %1772 = vmatprep.subr.mxu0 0.0
    %1773 = vmatpush1.msra.mxu0 0.0
    %1774 = vmatprep.mubr.f32.mxu0 0.0
    %1775 = vmatmul.mubr.f32.gmra.mrb[0].mxu0 %v1709
    %v1776 = vpop.f32.mrb[0].mxu0
    %v1777 = vadd.f32 0.0, %v1776
    %v1778 = vpop.f32.mrb[0].mxu0
    %1779 = vdwg.mxu0
    %1780 = vmatprep.subr.mxu0 0.0
    %1781 = vmatpush1.msra.mxu0 %v264
    %1782 = vmatprep.subr.mxu0 0.0
    %1783 = vmatpush1.msra.mxu0 %v265
    %1784 = vmatprep.subr.mxu0 0.0
    %1785 = vmatpush1.msra.mxu0 %v266
    %1786 = vmatprep.subr.mxu0 0.0
    %1787 = vmatpush1.msra.mxu0 %v267
    %1788 = vmatprep.subr.mxu0 0.0
    %1789 = vmatpush1.msra.mxu0 %v268
    %1790 = vmatprep.subr.mxu0 0.0
    %1791 = vmatpush1.msra.mxu0 %v269
    %1792 = vmatprep.subr.mxu0 0.0
    %1793 = vmatpush1.msra.mxu0 %v270
    %1794 = vmatprep.subr.mxu0 0.0
    %1795 = vmatpush1.msra.mxu0 %v271
    %1796 = vmatprep.subr.mxu0 0.0
    %1797 = vmatpush1.msra.mxu0 %v272
    %1798 = vmatprep.subr.mxu0 0.0
    %1799 = vmatpush1.msra.mxu0 %v273
    %1800 = vmatprep.subr.mxu0 0.0
    %1801 = vmatpush1.msra.mxu0 %v274
    %1802 = vmatprep.subr.mxu0 0.0
    %1803 = vmatpush1.msra.mxu0 %v275
    %1804 = vmatprep.subr.mxu0 0.0
    %1805 = vmatpush1.msra.mxu0 %v276
    %1806 = vmatprep.subr.mxu0 0.0
    %1807 = vmatpush1.msra.mxu0 %v277
    %1808 = vmatprep.subr.mxu0 0.0
    %1809 = vmatpush1.msra.mxu0 %v278
    %1810 = vmatprep.subr.mxu0 0.0
    %1811 = vmatpush1.msra.mxu0 %v279
    %1812 = vmatprep.subr.mxu0 0.0
    %1813 = vmatpush1.msra.mxu0 0.0
    %1814 = vmatprep.subr.mxu0 0.0
    %1815 = vmatpush1.msra.mxu0 0.0
    %1816 = vmatprep.subr.mxu0 0.0
    %1817 = vmatpush1.msra.mxu0 0.0
    %1818 = vmatprep.subr.mxu0 0.0
    %1819 = vmatpush1.msra.mxu0 0.0
    %1820 = vmatprep.subr.mxu0 0.0
    %1821 = vmatpush1.msra.mxu0 0.0
    %1822 = vmatprep.subr.mxu0 0.0
    %1823 = vmatpush1.msra.mxu0 0.0
    %1824 = vmatprep.subr.mxu0 0.0
    %1825 = vmatpush1.msra.mxu0 0.0
    %1826 = vmatprep.subr.mxu0 0.0
    %1827 = vmatpush1.msra.mxu0 0.0
    %1828 = vmatprep.subr.mxu0 0.0
    %1829 = vmatpush1.msra.mxu0 0.0
    %1830 = vmatprep.subr.mxu0 0.0
    %1831 = vmatpush1.msra.mxu0 0.0
    %1832 = vmatprep.subr.mxu0 0.0
    %1833 = vmatpush1.msra.mxu0 0.0
    %1834 = vmatprep.subr.mxu0 0.0
    %1835 = vmatpush1.msra.mxu0 0.0
    %1836 = vmatprep.subr.mxu0 0.0
    %1837 = vmatpush1.msra.mxu0 0.0
    %1838 = vmatprep.subr.mxu0 0.0
    %1839 = vmatpush1.msra.mxu0 0.0
    %1840 = vmatprep.subr.mxu0 0.0
    %1841 = vmatpush1.msra.mxu0 0.0
    %1842 = vmatprep.subr.mxu0 0.0
    %1843 = vmatpush1.msra.mxu0 0.0
    %1844 = vmatprep.mubr.f32.mxu0 0.0
    %1845 = vmatmul.mubr.f32.gmra.mrb[0].mxu0 %v1707
    %v1846 = vpop.f32.mrb[0].mxu0
    %v1847 = vadd.f32 %v1777, %v1846
    %v1848 = vpop.f32.mrb[0].mxu0
    %1849 = vdwg.mxu0
    %v1850 = vadd.f32 %v1847, %v301
    %v1851 = vtanh.pop %v1850
    %1852 = vst [vmem:[#allocation2 + $0x8] sm:$0xff] %v1851
    %s1853 = scalar_lea.vmem [#allocation4], 48
    %1854 = vst [vmem:[%s1853] sm:$0xff] %v1851
    %s1855 = scalar_lea.vmem [#allocation3], 56
    %v1856 = vld [vmem:[%s1855] sm:$0xff]
    %v1857 = vld [vmem:[#allocation2] sm:$0xff]
    %1858 = vmatprep.subr.mxu0 0.0
    %1859 = vmatpush1.msra.mxu0 %v248
    %1860 = vmatprep.subr.mxu0 0.0
    %1861 = vmatpush1.msra.mxu0 %v249
    %1862 = vmatprep.subr.mxu0 0.0
    %1863 = vmatpush1.msra.mxu0 %v250
    %1864 = vmatprep.subr.mxu0 0.0
    %1865 = vmatpush1.msra.mxu0 %v251
    %1866 = vmatprep.subr.mxu0 0.0
    %1867 = vmatpush1.msra.mxu0 %v252
    %1868 = vmatprep.subr.mxu0 0.0
    %1869 = vmatpush1.msra.mxu0 %v253
    %1870 = vmatprep.subr.mxu0 0.0
    %1871 = vmatpush1.msra.mxu0 %v254
    %1872 = vmatprep.subr.mxu0 0.0
    %1873 = vmatpush1.msra.mxu0 %v255
    %1874 = vmatprep.subr.mxu0 0.0
    %1875 = vmatpush1.msra.mxu0 %v256
    %1876 = vmatprep.subr.mxu0 0.0
    %1877 = vmatpush1.msra.mxu0 %v257
    %1878 = vmatprep.subr.mxu0 0.0
    %1879 = vmatpush1.msra.mxu0 %v258
    %1880 = vmatprep.subr.mxu0 0.0
    %1881 = vmatpush1.msra.mxu0 %v259
    %1882 = vmatprep.subr.mxu0 0.0
    %1883 = vmatpush1.msra.mxu0 %v260
    %1884 = vmatprep.subr.mxu0 0.0
    %1885 = vmatpush1.msra.mxu0 %v261
    %1886 = vmatprep.subr.mxu0 0.0
    %1887 = vmatpush1.msra.mxu0 %v262
    %1888 = vmatprep.subr.mxu0 0.0
    %1889 = vmatpush1.msra.mxu0 %v263
    %1890 = vmatprep.subr.mxu0 0.0
    %1891 = vmatpush1.msra.mxu0 0.0
    %1892 = vmatprep.subr.mxu0 0.0
    %1893 = vmatpush1.msra.mxu0 0.0
    %1894 = vmatprep.subr.mxu0 0.0
    %1895 = vmatpush1.msra.mxu0 0.0
    %1896 = vmatprep.subr.mxu0 0.0
    %1897 = vmatpush1.msra.mxu0 0.0
    %1898 = vmatprep.subr.mxu0 0.0
    %1899 = vmatpush1.msra.mxu0 0.0
    %1900 = vmatprep.subr.mxu0 0.0
    %1901 = vmatpush1.msra.mxu0 0.0
    %1902 = vmatprep.subr.mxu0 0.0
    %1903 = vmatpush1.msra.mxu0 0.0
    %1904 = vmatprep.subr.mxu0 0.0
    %1905 = vmatpush1.msra.mxu0 0.0
    %1906 = vmatprep.subr.mxu0 0.0
    %1907 = vmatpush1.msra.mxu0 0.0
    %1908 = vmatprep.subr.mxu0 0.0
    %1909 = vmatpush1.msra.mxu0 0.0
    %1910 = vmatprep.subr.mxu0 0.0
    %1911 = vmatpush1.msra.mxu0 0.0
    %1912 = vmatprep.subr.mxu0 0.0
    %1913 = vmatpush1.msra.mxu0 0.0
    %1914 = vmatprep.subr.mxu0 0.0
    %1915 = vmatpush1.msra.mxu0 0.0
    %1916 = vmatprep.subr.mxu0 0.0
    %1917 = vmatpush1.msra.mxu0 0.0
    %1918 = vmatprep.subr.mxu0 0.0
    %1919 = vmatpush1.msra.mxu0 0.0
    %1920 = vmatprep.subr.mxu0 0.0
    %1921 = vmatpush1.msra.mxu0 0.0
    %1922 = vmatprep.mubr.f32.mxu0 0.0
    %1923 = vmatmul.mubr.f32.gmra.mrb[0].mxu0 %v1857
    %v1924 = vpop.f32.mrb[0].mxu0
    %v1925 = vadd.f32 0.0, %v1924
    %v1926 = vpop.f32.mrb[0].mxu0
    %1927 = vdwg.mxu0
    %v1928 = vadd.f32 %v1856, %v1925
    %v1929 = vtanh.pop %v1928
    %1930 = vst [vmem:[#allocation2] sm:$0xff] %v1929
    %v1931 = vld [vmem:[#allocation2 + $0x8] sm:$0xff]
    %1932 = vmatprep.subr.mxu0 0.0
    %1933 = vmatpush1.msra.mxu0 %v280
    %1934 = vmatprep.subr.mxu0 0.0
    %1935 = vmatpush1.msra.mxu0 %v281
    %1936 = vmatprep.subr.mxu0 0.0
    %1937 = vmatpush1.msra.mxu0 %v282
    %1938 = vmatprep.subr.mxu0 0.0
    %1939 = vmatpush1.msra.mxu0 %v283
    %1940 = vmatprep.subr.mxu0 0.0
    %1941 = vmatpush1.msra.mxu0 %v284
    %1942 = vmatprep.subr.mxu0 0.0
    %1943 = vmatpush1.msra.mxu0 %v285
    %1944 = vmatprep.subr.mxu0 0.0
    %1945 = vmatpush1.msra.mxu0 %v286
    %1946 = vmatprep.subr.mxu0 0.0
    %1947 = vmatpush1.msra.mxu0 %v287
    %1948 = vmatprep.subr.mxu0 0.0
    %1949 = vmatpush1.msra.mxu0 %v288
    %1950 = vmatprep.subr.mxu0 0.0
    %1951 = vmatpush1.msra.mxu0 %v289
    %1952 = vmatprep.subr.mxu0 0.0
    %1953 = vmatpush1.msra.mxu0 %v290
    %1954 = vmatprep.subr.mxu0 0.0
    %1955 = vmatpush1.msra.mxu0 %v291
    %1956 = vmatprep.subr.mxu0 0.0
    %1957 = vmatpush1.msra.mxu0 %v292
    %1958 = vmatprep.subr.mxu0 0.0
    %1959 = vmatpush1.msra.mxu0 %v293
    %1960 = vmatprep.subr.mxu0 0.0
    %1961 = vmatpush1.msra.mxu0 %v294
    %1962 = vmatprep.subr.mxu0 0.0
    %1963 = vmatpush1.msra.mxu0 %v295
    %1964 = vmatprep.subr.mxu0 0.0
    %1965 = vmatpush1.msra.mxu0 0.0
    %1966 = vmatprep.subr.mxu0 0.0
    %1967 = vmatpush1.msra.mxu0 0.0
    %1968 = vmatprep.subr.mxu0 0.0
    %1969 = vmatpush1.msra.mxu0 0.0
    %1970 = vmatprep.subr.mxu0 0.0
    %1971 = vmatpush1.msra.mxu0 0.0
    %1972 = vmatprep.subr.mxu0 0.0
    %1973 = vmatpush1.msra.mxu0 0.0
    %1974 = vmatprep.subr.mxu0 0.0
    %1975 = vmatpush1.msra.mxu0 0.0
    %1976 = vmatprep.subr.mxu0 0.0
    %1977 = vmatpush1.msra.mxu0 0.0
    %1978 = vmatprep.subr.mxu0 0.0
    %1979 = vmatpush1.msra.mxu0 0.0
    %1980 = vmatprep.subr.mxu0 0.0
    %1981 = vmatpush1.msra.mxu0 0.0
    %1982 = vmatprep.subr.mxu0 0.0
    %1983 = vmatpush1.msra.mxu0 0.0
    %1984 = vmatprep.subr.mxu0 0.0
    %1985 = vmatpush1.msra.mxu0 0.0
    %1986 = vmatprep.subr.mxu0 0.0
    %1987 = vmatpush1.msra.mxu0 0.0
    %1988 = vmatprep.subr.mxu0 0.0
    %1989 = vmatpush1.msra.mxu0 0.0
    %1990 = vmatprep.subr.mxu0 0.0
    %1991 = vmatpush1.msra.mxu0 0.0
    %1992 = vmatprep.subr.mxu0 0.0
    %1993 = vmatpush1.msra.mxu0 0.0
    %1994 = vmatprep.subr.mxu0 0.0
    %1995 = vmatpush1.msra.mxu0 0.0
    %1996 = vmatprep.mubr.f32.mxu0 0.0
    %1997 = vmatmul.mubr.f32.gmra.mrb[0].mxu0 %v1931
    %v1998 = vpop.f32.mrb[0].mxu0
    %v1999 = vadd.f32 0.0, %v1998
    %v2000 = vpop.f32.mrb[0].mxu0
    %2001 = vdwg.mxu0
    %2002 = vmatprep.subr.mxu0 0.0
    %2003 = vmatpush1.msra.mxu0 %v264
    %2004 = vmatprep.subr.mxu0 0.0
    %2005 = vmatpush1.msra.mxu0 %v265
    %2006 = vmatprep.subr.mxu0 0.0
    %2007 = vmatpush1.msra.mxu0 %v266
    %2008 = vmatprep.subr.mxu0 0.0
    %2009 = vmatpush1.msra.mxu0 %v267
    %2010 = vmatprep.subr.mxu0 0.0
    %2011 = vmatpush1.msra.mxu0 %v268
    %2012 = vmatprep.subr.mxu0 0.0
    %2013 = vmatpush1.msra.mxu0 %v269
    %2014 = vmatprep.subr.mxu0 0.0
    %2015 = vmatpush1.msra.mxu0 %v270
    %2016 = vmatprep.subr.mxu0 0.0
    %2017 = vmatpush1.msra.mxu0 %v271
    %2018 = vmatprep.subr.mxu0 0.0
    %2019 = vmatpush1.msra.mxu0 %v272
    %2020 = vmatprep.subr.mxu0 0.0
    %2021 = vmatpush1.msra.mxu0 %v273
    %2022 = vmatprep.subr.mxu0 0.0
    %2023 = vmatpush1.msra.mxu0 %v274
    %2024 = vmatprep.subr.mxu0 0.0
    %2025 = vmatpush1.msra.mxu0 %v275
    %2026 = vmatprep.subr.mxu0 0.0
    %2027 = vmatpush1.msra.mxu0 %v276
    %2028 = vmatprep.subr.mxu0 0.0
    %2029 = vmatpush1.msra.mxu0 %v277
    %2030 = vmatprep.subr.mxu0 0.0
    %2031 = vmatpush1.msra.mxu0 %v278
    %2032 = vmatprep.subr.mxu0 0.0
    %2033 = vmatpush1.msra.mxu0 %v279
    %2034 = vmatprep.subr.mxu0 0.0
    %2035 = vmatpush1.msra.mxu0 0.0
    %2036 = vmatprep.subr.mxu0 0.0
    %2037 = vmatpush1.msra.mxu0 0.0
    %2038 = vmatprep.subr.mxu0 0.0
    %2039 = vmatpush1.msra.mxu0 0.0
    %2040 = vmatprep.subr.mxu0 0.0
    %2041 = vmatpush1.msra.mxu0 0.0
    %2042 = vmatprep.subr.mxu0 0.0
    %2043 = vmatpush1.msra.mxu0 0.0
    %2044 = vmatprep.subr.mxu0 0.0
    %2045 = vmatpush1.msra.mxu0 0.0
    %2046 = vmatprep.subr.mxu0 0.0
    %2047 = vmatpush1.msra.mxu0 0.0
    %2048 = vmatprep.subr.mxu0 0.0
    %2049 = vmatpush1.msra.mxu0 0.0
    %2050 = vmatprep.subr.mxu0 0.0
    %2051 = vmatpush1.msra.mxu0 0.0
    %2052 = vmatprep.subr.mxu0 0.0
    %2053 = vmatpush1.msra.mxu0 0.0
    %2054 = vmatprep.subr.mxu0 0.0
    %2055 = vmatpush1.msra.mxu0 0.0
    %2056 = vmatprep.subr.mxu0 0.0
    %2057 = vmatpush1.msra.mxu0 0.0
    %2058 = vmatprep.subr.mxu0 0.0
    %2059 = vmatpush1.msra.mxu0 0.0
    %2060 = vmatprep.subr.mxu0 0.0
    %2061 = vmatpush1.msra.mxu0 0.0
    %2062 = vmatprep.subr.mxu0 0.0
    %2063 = vmatpush1.msra.mxu0 0.0
    %2064 = vmatprep.subr.mxu0 0.0
    %2065 = vmatpush1.msra.mxu0 0.0
    %2066 = vmatprep.mubr.f32.mxu0 0.0
    %2067 = vmatmul.mubr.f32.gmra.mrb[0].mxu0 %v1929
    %v2068 = vpop.f32.mrb[0].mxu0
    %v2069 = vadd.f32 %v1999, %v2068
    %v2070 = vpop.f32.mrb[0].mxu0
    %2071 = vdwg.mxu0
    %v2072 = vadd.f32 %v2069, %v301
    %v2073 = vtanh.pop %v2072
    %2074 = vst [vmem:[#allocation2 + $0x8] sm:$0xff] %v2073
    %s2075 = scalar_lea.vmem [#allocation4], 56
    %2076 = vst [vmem:[%s2075] sm:$0xff] %v2073
    %v2077 = vld [vmem:[#allocation4] sm:$0xff]
    %v2078 = vld [vmem:[#allocation4 + $0x8] sm:$0xff]
    %v2079 = vld [vmem:[#allocation4 + $0x10] sm:$0xff]
    %v2080 = vld [vmem:[#allocation4 + $0x18] sm:$0xff]
    %v2081 = vld [vmem:[#allocation4 + $0x20] sm:$0xff]
    %v2082 = vld [vmem:[#allocation4 + $0x28] sm:$0xff]
    %v2083 = vld [vmem:[#allocation4 + $0x30] sm:$0xff]
    %v2084 = vld [vmem:[#allocation4 + $0x38] sm:$0xff]
    %v2085 = vld [vmem:[#allocation11] sm:$0xff]
    %v2086 = vld [vmem:[#allocation11 + $0x8] sm:$0xff]
    %v2087 = vld [vmem:[#allocation11 + $0x10] sm:$0xff]
    %v2088 = vld [vmem:[#allocation11 + $0x18] sm:$0xff]
    %v2089 = vld [vmem:[#allocation11 + $0x20] sm:$0xff]
    %v2090 = vld [vmem:[#allocation11 + $0x28] sm:$0xff]
    %v2091 = vld [vmem:[#allocation11 + $0x30] sm:$0xff]
    %v2092 = vld [vmem:[#allocation11 + $0x38] sm:$0xff]
    %v2093 = vld [vmem:[#allocation11 + $0x40] sm:$0xff]
    %v2094 = vld [vmem:[#allocation11 + $0x48] sm:$0xff]
    %v2095 = vld [vmem:[#allocation11 + $0x50] sm:$0xff]
    %v2096 = vld [vmem:[#allocation11 + $0x58] sm:$0xff]
    %v2097 = vld [vmem:[#allocation11 + $0x60] sm:$0xff]
    %v2098 = vld [vmem:[#allocation11 + $0x68] sm:$0xff]
    %v2099 = vld [vmem:[#allocation11 + $0x70] sm:$0xff]
    %v2100 = vld [vmem:[#allocation11 + $0x78] sm:$0xff]
    %v2101 = vld [vmem:[%s8] sm:$0x1]
    %v2103 = vlaneseq
    %v2104 = vshrl.u32 %v2103, 7
    %v2105 = vsub.s32 0, %v2104
    %v2106 = vrot.slane %v2101, %v2105
    %2108 = vmatprep.subr.mxu0 0.0
    %2109 = vmatpush1.msra.mxu0 %v2085
    %2110 = vmatprep.subr.mxu0 0.0
    %2111 = vmatpush1.msra.mxu0 %v2086
    %2112 = vmatprep.subr.mxu0 0.0
    %2113 = vmatpush1.msra.mxu0 %v2087
    %2114 = vmatprep.subr.mxu0 0.0
    %2115 = vmatpush1.msra.mxu0 %v2088
    %2116 = vmatprep.subr.mxu0 0.0
    %2117 = vmatpush1.msra.mxu0 %v2089
    %2118 = vmatprep.subr.mxu0 0.0
    %2119 = vmatpush1.msra.mxu0 %v2090
    %2120 = vmatprep.subr.mxu0 0.0
    %2121 = vmatpush1.msra.mxu0 %v2091
    %2122 = vmatprep.subr.mxu0 0.0
    %2123 = vmatpush1.msra.mxu0 %v2092
    %2124 = vmatprep.subr.mxu0 0.0
    %2125 = vmatpush1.msra.mxu0 %v2093
    %2126 = vmatprep.subr.mxu0 0.0
    %2127 = vmatpush1.msra.mxu0 %v2094
    %2128 = vmatprep.subr.mxu0 0.0
    %2129 = vmatpush1.msra.mxu0 %v2095
    %2130 = vmatprep.subr.mxu0 0.0
    %2131 = vmatpush1.msra.mxu0 %v2096
    %2132 = vmatprep.subr.mxu0 0.0
    %2133 = vmatpush1.msra.mxu0 %v2097
    %2134 = vmatprep.subr.mxu0 0.0
    %2135 = vmatpush1.msra.mxu0 %v2098
    %2136 = vmatprep.subr.mxu0 0.0
    %2137 = vmatpush1.msra.mxu0 %v2099
    %2138 = vmatprep.subr.mxu0 0.0
    %2139 = vmatpush1.msra.mxu0 %v2100
    %2140 = vmatprep.subr.mxu0 0.0
    %2141 = vmatpush1.msra.mxu0 0.0
    %2142 = vmatprep.subr.mxu0 0.0
    %2143 = vmatpush1.msra.mxu0 0.0
    %2144 = vmatprep.subr.mxu0 0.0
    %2145 = vmatpush1.msra.mxu0 0.0
    %2146 = vmatprep.subr.mxu0 0.0
    %2147 = vmatpush1.msra.mxu0 0.0
    %2148 = vmatprep.subr.mxu0 0.0
    %2149 = vmatpush1.msra.mxu0 0.0
    %2150 = vmatprep.subr.mxu0 0.0
    %2151 = vmatpush1.msra.mxu0 0.0
    %2152 = vmatprep.subr.mxu0 0.0
    %2153 = vmatpush1.msra.mxu0 0.0
    %2154 = vmatprep.subr.mxu0 0.0
    %2155 = vmatpush1.msra.mxu0 0.0
    %2156 = vmatprep.subr.mxu0 0.0
    %2157 = vmatpush1.msra.mxu0 0.0
    %2158 = vmatprep.subr.mxu0 0.0
    %2159 = vmatpush1.msra.mxu0 0.0
    %2160 = vmatprep.subr.mxu0 0.0
    %2161 = vmatpush1.msra.mxu0 0.0
    %2162 = vmatprep.subr.mxu0 0.0
    %2163 = vmatpush1.msra.mxu0 0.0
    %2164 = vmatprep.subr.mxu0 0.0
    %2165 = vmatpush1.msra.mxu0 0.0
    %2166 = vmatprep.subr.mxu0 0.0
    %2167 = vmatpush1.msra.mxu0 0.0
    %2168 = vmatprep.subr.mxu0 0.0
    %2169 = vmatpush1.msra.mxu0 0.0
    %2170 = vmatprep.subr.mxu0 0.0
    %2171 = vmatpush1.msra.mxu0 0.0
    %2172 = vmatprep.mubr.f32.mxu0 0.0
    %2173 = vmatmul.mubr.f32.gmra.mrb[0].mxu0 %v2077
    %v2174 = vpop.f32.mrb[0].mxu0
    %v2175 = vadd.f32 %v2106, %v2174
    %v2176 = vpop.f32.mrb[0].mxu0
    %2177 = vmatprep.mubr.f32.mxu0 0.0
    %2178 = vmatmul.mubr.f32.gmra.mrb[0].mxu0 %v2078
    %v2179 = vpop.f32.mrb[0].mxu0
    %v2180 = vadd.f32 %v2106, %v2179
    %v2181 = vpop.f32.mrb[0].mxu0
    %2182 = vmatprep.mubr.f32.mxu0 0.0
    %2183 = vmatmul.mubr.f32.gmra.mrb[0].mxu0 %v2079
    %v2184 = vpop.f32.mrb[0].mxu0
    %v2185 = vadd.f32 %v2106, %v2184
    %v2186 = vpop.f32.mrb[0].mxu0
    %2187 = vmatprep.mubr.f32.mxu0 0.0
    %2188 = vmatmul.mubr.f32.gmra.mrb[0].mxu0 %v2080
    %v2189 = vpop.f32.mrb[0].mxu0
    %v2190 = vadd.f32 %v2106, %v2189
    %v2191 = vpop.f32.mrb[0].mxu0
    %2192 = vmatprep.mubr.f32.mxu0 0.0
    %2193 = vmatmul.mubr.f32.gmra.mrb[0].mxu0 %v2081
    %v2194 = vpop.f32.mrb[0].mxu0
    %v2195 = vadd.f32 %v2106, %v2194
    %v2196 = vpop.f32.mrb[0].mxu0
    %2197 = vmatprep.mubr.f32.mxu0 0.0
    %2198 = vmatmul.mubr.f32.gmra.mrb[0].mxu0 %v2082
    %v2199 = vpop.f32.mrb[0].mxu0
    %v2200 = vadd.f32 %v2106, %v2199
    %v2201 = vpop.f32.mrb[0].mxu0
    %2202 = vmatprep.mubr.f32.mxu0 0.0
    %2203 = vmatmul.mubr.f32.gmra.mrb[0].mxu0 %v2083
    %v2204 = vpop.f32.mrb[0].mxu0
    %v2205 = vadd.f32 %v2106, %v2204
    %v2206 = vpop.f32.mrb[0].mxu0
    %2207 = vmatprep.mubr.f32.mxu0 0.0
    %2208 = vmatmul.mubr.f32.gmra.mrb[0].mxu0 %v2084
    %v2209 = vpop.f32.mrb[0].mxu0
    %v2210 = vadd.f32 %v2106, %v2209
    %v2211 = vpop.f32.mrb[0].mxu0
    %2212 = vdwg.mxu0
    %2213 = vst [vmem:[#allocation13] sm:$0xff] %v2175
    %2214 = vst [vmem:[#allocation13 + $0x8] sm:$0xff] %v2180
    %2215 = vst [vmem:[#allocation13 + $0x10] sm:$0xff] %v2185
    %2216 = vst [vmem:[#allocation13 + $0x18] sm:$0xff] %v2190
    %2217 = vst [vmem:[#allocation13 + $0x20] sm:$0xff] %v2195
    %2218 = vst [vmem:[#allocation13 + $0x28] sm:$0xff] %v2200
    %2219 = vst [vmem:[#allocation13 + $0x30] sm:$0xff] %v2205
    %2220 = vst [vmem:[#allocation13 + $0x38] sm:$0xff] %v2210
    %v2221 = vld [vmem:[#allocation2] sm:$0xff]
    %v2222 = vld [vmem:[#allocation2 + $0x8] sm:$0xff]
    %2223 = vst [vmem:[#allocation14] sm:$0xff] %v2221
    %2224 = vst [vmem:[#allocation14 + $0x8] sm:$0xff] %v2222
    // Predicated region
    $region54: #{tpu_custom_call.1} parent=1 // pred_check
      _
    $region55: #{tpu_custom_call.1} parent=1 // pred_check_branch
      %2226 = sbr.rel (0) target = $region57
    $region56: #{tpu_custom_call.1} parent=1 // pred_region
      %s2228 = ssub.s32 1024, 1024
      %2229 = vsyncadd [#allocation7], %s2228
      %s2230 = sshll.u32 [#allocation13], 4
      %s2231 = int_to_ptr.vmem [resolvable:$true] %s2230
      %2236 = dma.vmem_to_hbm [thread:$0]  %s2231, 1024, %s9, [#allocation7], 128, 128, 8
    $region57: #{tpu_custom_call.1} parent=1 // pred_fallthru
      _
    // Predicated region
    $region58: #{tpu_custom_call.1} parent=1 // pred_check
      _
    $region59: #{tpu_custom_call.1} parent=1 // pred_check_branch
      %2238 = sbr.rel (0) target = $region61
    $region60: #{tpu_custom_call.1} parent=1 // pred_region
      %s2240 = ssub.s32 256, 256
      %2241 = vsyncadd [#allocation15], %s2240
      %s2242 = sshll.u32 [#allocation14], 4
      %s2243 = int_to_ptr.vmem [resolvable:$true] %s2242
      %2248 = dma.vmem_to_hbm [thread:$0]  %s2243, 256, %s10, [#allocation15], 128, 128, 8
    $region61: #{tpu_custom_call.1} parent=1 // pred_fallthru
      _
    // Predicated region
    $region62: #{tpu_custom_call.1} parent=1 // pred_check
      _
    $region63: #{tpu_custom_call.1} parent=1 // pred_check_branch
      %2250 = sbr.rel (0) target = $region65
    $region64: #{tpu_custom_call.1} parent=1 // pred_region
      %2251 = dma.done [#allocation7], 1024
    $region65: #{tpu_custom_call.1} parent=1 // pred_fallthru
      _
    // Predicated region
    $region66: #{tpu_custom_call.1} parent=1 // pred_check
      _
    $region67: #{tpu_custom_call.1} parent=1 // pred_check_branch
      %2253 = sbr.rel (0) target = $region69
    $region68: #{tpu_custom_call.1} parent=1 // pred_region
      %2254 = dma.done [#allocation15], 256
    $region69: #{tpu_custom_call.1} parent=1 // pred_fallthru
      _
    %2255 = vsyncpa [#allocation6], 1
    %2256 = vsyncpa [#allocation9], 1
    %2257 = vsyncpa [#allocation12], 1
    %2258 = vsyncpa [#allocation7], 1
    %2259 = vsyncpa [#allocation15], 1

</llo_original>
